<compile_context>
chip_gen: v7x
topology: tpu7x:2x2x1
jax: 0.10.0
libtpu: 0.0.40
codegen_flags: <defaults>
</compile_context>

<pallas_src>
import math
from functools import partial

import jax
import jax.numpy as jnp
from jax.experimental import pallas as pl
from jax.experimental.pallas import tpu as pltpu


def _mha_kernel(x_ref, wqkv_ref, bqkv_ref, eq_ref, gs_ref, ar_ref, gctx_ref,
                wo_ref, bo_ref, o_ref, *, n_head, n_key, n_value):
    # x_ref: (Bb, T, n_in) bf16 time-major block; o_ref: (Bb, T, n_out) f32.
    # wqkv/wo/eq/gs/ar/gctx: bf16 MXU operands; bqkv/bo: f32 biases.
    bb, n_time, n_in = x_ref.shape
    m = bb * n_time
    h_nk = n_head * n_key
    hh = n_head * n_head

    # --- fused QKV projection: one bf16 MXU matmul, f32 accumulate + f32 bias add.
    x2 = x_ref[...].reshape(m, n_in)                                   # merge leading dims (cheap)
    qkv = jnp.dot(x2, wqkv_ref[...], preferred_element_type=jnp.float32) + bqkv_ref[...]
    q = qkv[:, :h_nk]              # 1/sqrt(nk) already folded into the q weights/bias
    k = qkv[:, h_nk:2 * h_nk]
    v = qkv[:, 2 * h_nk:]

    # --- all (i,j) head-pair scores in one pass.
    # q_exp[:, (i*H+j)*nk+d] = q_i[d]  (exact lane expansion via 0/1 selector matmul)
    # k_exp[:, (i*H+j)*nk+d] = k_j[d]  (whole-array lane tile)
    q_exp = jnp.dot(q.astype(jnp.bfloat16), eq_ref[...], preferred_element_type=jnp.float32)
    k_exp = jnp.tile(k, (1, n_head))
    prod = (q_exp * k_exp).astype(jnp.bfloat16)                        # (M, H*H*nk)
    scores = jnp.dot(prod, gs_ref[...], preferred_element_type=jnp.float32)   # (M, H*H)

    # --- softmax over TIME (torch: softmax(scores, dim=1)), per batch element in the block.
    s3 = scores.reshape(bb, n_time, hh)
    s_max = jnp.max(s3, axis=1, keepdims=True)
    ex = jnp.exp(s3 - s_max)
    denom = jnp.sum(ex, axis=1, keepdims=True)
    attn = (ex * pl.reciprocal(denom, approx=True)).reshape(m, hh)
    # TODO(synk): attention dropout omitted (module default dropout_rate=0.0 -> no-op).

    # --- context: ctx[:, i*nv+e] = sum_j attn[:, i*H+j] * v[:, j*nv+e]
    # attn lane-expand (each column repeated nv times) + value tile + grouped sum over j,
    # all as tiny MXU matmuls — no per-column lane broadcasts.
    a_rep = jnp.dot(attn.astype(jnp.bfloat16), ar_ref[...], preferred_element_type=jnp.float32)
    v_exp = jnp.tile(v, (1, n_head))                                   # (M, H*H*nv)
    prod2 = (a_rep * v_exp).astype(jnp.bfloat16)
    ctx = jnp.dot(prod2, gctx_ref[...], preferred_element_type=jnp.float32)    # (M, H*nv)

    # --- output projection, stored lane-dense in (Bb, T, n_out).
    out = jnp.dot(ctx.astype(jnp.bfloat16), wo_ref[...],
                  preferred_element_type=jnp.float32) + bo_ref[...]
    o_ref[...] = out.reshape(bb, n_time, o_ref.shape[2]).astype(o_ref.dtype)


def _tpu_budget():
    """(VMEM capacity bytes, MXU-row target per grid step) — generation aware."""
    vmem_cap = 128 * 2 ** 20
    try:
        info = pltpu.get_tpu_info()
        vmem_cap = int(getattr(info, "vmem_capacity_bytes", vmem_cap))
    except Exception:
        pass
    if vmem_cap <= 80 * 2 ** 20:       # v7x-class: 64 MiB VMEM per TensorCore -> smaller tiles
        return vmem_cap, 256
    return vmem_cap, 512               # v5e / v6e: 128 MiB VMEM -> bigger tiles amortize overhead


def _vmem_estimate(bb, n_time, n_in, n_out, n_head, n_key, n_value):
    """Rough per-step VMEM bytes: I/O blocks, resident operands, live intermediates."""
    m = bb * n_time
    hh = n_head * n_head
    c_qkv = n_head * (2 * n_key + n_value)
    hhnk, hhnv, hnv, hnk = hh * n_key, hh * n_value, n_head * n_value, n_head * n_key
    io = 2 * m * (2 * n_in + 4 * n_out)
    wts = 2 * 2 * (n_in * c_qkv + hnk * hhnk + hhnk * hh + hh * hhnv + hhnv * hnv
                   + hnv * n_out) + 2 * 4 * (c_qkv + n_out)
    live = 4 * m * (n_in + c_qkv + 3 * hhnk + 3 * hh + 3 * hhnv + hnv + 2 * n_out)
    return io + wts + live


def _pick_batch_block(n_batch, n_time, row_target, est_fn, vmem_budget):
    """Pack batch elements per grid step up to ~row_target MXU rows, keep an exact split,
    keep >=2 grid steps when possible (2 TensorCores on v7x / megacore), and stay in VMEM."""
    bb = max(1, min(n_batch, max(1, row_target // max(n_time, 1))))
    while bb > 1 and (n_batch % bb != 0 or n_batch // bb < 2
                      or est_fn(bb) > vmem_budget):
        bb -= 1
    return bb


@partial(jax.jit, static_argnames=("n_head", "n_key", "n_value", "batch_block",
                                   "vmem_limit", "single_buffer_weights"))
def _mha_impl(x_ncw, params, *, n_head, n_key, n_value, batch_block, vmem_limit,
              single_buffer_weights):
    W_pos, b_pos, W_out, b_out = (params[k] for k in ("W_pos", "b_pos", "W_out", "b_out"))
    B, n_in, T = x_ncw.shape
    n_out = W_out.shape[0]
    S = 2 * n_key + n_value
    h_nk, h_nv, hh = n_head * n_key, n_head * n_value, n_head * n_head
    c_qkv = n_head * S

    # --- parameter repack (pure glue, folded into this jit): fused [q|k|v] projection with
    # the 1/sqrt(nk) scale folded into the q columns; MXU operands in bf16, biases in f32.
    scale = 1.0 / math.sqrt(n_key)
    Wr = W_pos.reshape(n_head, S, n_in)
    br = b_pos.reshape(n_head, S)
    wq = Wr[:, :n_key, :].reshape(h_nk, n_in).T * scale
    wk = Wr[:, n_key:2 * n_key, :].reshape(h_nk, n_in).T
    wv = Wr[:, 2 * n_key:, :].reshape(h_nv, n_in).T
    wqkv = jnp.concatenate([wq, wk, wv], axis=1).astype(jnp.bfloat16)          # (n_in, c_qkv)
    bqkv = jnp.concatenate([br[:, :n_key].reshape(-1) * scale,
                            br[:, n_key:2 * n_key].reshape(-1),
                            br[:, 2 * n_key:].reshape(-1)]).reshape(1, c_qkv).astype(jnp.float32)
    wo = W_out.T.astype(jnp.bfloat16)                                          # (h_nv, n_out)
    bo = b_out.reshape(1, n_out).astype(jnp.float32)

    # --- constant 0/1 selector matrices, hoisted out of the kernel (bf16 MXU operands).
    rc = jnp.arange(hh * n_key)
    eq = ((jnp.arange(h_nk)[:, None] // n_key == rc[None, :] // h_nk)
          & (jnp.arange(h_nk)[:, None] % n_key == rc[None, :] % n_key)).astype(jnp.bfloat16)
    gs = (rc[:, None] // n_key == jnp.arange(hh)[None, :]).astype(jnp.bfloat16)
    rv = jnp.arange(hh * n_value)
    ar = (jnp.arange(hh)[:, None] == rv[None, :] // n_value).astype(jnp.bfloat16)
    gctx = ((rv[:, None] // h_nv == jnp.arange(h_nv)[None, :] // n_value)
            & (rv[:, None] % n_value == jnp.arange(h_nv)[None, :] % n_value)).astype(jnp.bfloat16)

    # --- time-major, lane-dense I/O: single NCW->NTC transpose at the XLA level (HBM BW),
    # input shipped to the kernel in bf16 (it only feeds bf16 MXU pushes anyway).
    x_ntc = jnp.transpose(x_ncw, (0, 2, 1)).astype(jnp.bfloat16)               # (B, T, n_in)

    def _const_spec(arr):
        idx = lambda g: (0, 0)
        if single_buffer_weights:
            # resident operands: no dead second buffer (frees VMEM, esp. on v7x's 64 MiB)
            return pl.BlockSpec(arr.shape, idx, pipeline_mode=pl.Buffered(1))
        return pl.BlockSpec(arr.shape, idx)

    kernel = partial(_mha_kernel, n_head=n_head, n_key=n_key, n_value=n_value)
    out_ntc = pl.pallas_call(
        kernel,
        out_shape=jax.ShapeDtypeStruct((B, T, n_out), x_ncw.dtype),
        grid=(B // batch_block,),
        in_specs=[
            pl.BlockSpec((batch_block, T, n_in), lambda g: (g, 0, 0)),
            _const_spec(wqkv), _const_spec(bqkv), _const_spec(eq), _const_spec(gs),
            _const_spec(ar), _const_spec(gctx), _const_spec(wo), _const_spec(bo),
        ],
        out_specs=pl.BlockSpec((batch_block, T, n_out), lambda g: (g, 0, 0)),
        compiler_params=pltpu.CompilerParams(
            dimension_semantics=("parallel",),
            vmem_limit_bytes=vmem_limit,
        ),
    )(x_ntc, wqkv, bqkv, eq, gs, ar, gctx, wo, bo)

    return jnp.transpose(out_ntc, (0, 2, 1))                                    # back to NCW


def multi_head_attention(x_ncw, params, *, n_head, n_key, n_value, batch_block=None):
    """x_ncw: (B, n_in, T) float32 (NCW, like the PyTorch Conv1d input). Returns (B, n_out, T)."""
    B, n_in, T = x_ncw.shape
    n_out = params["W_out"].shape[0]
    vmem_cap, row_target = _tpu_budget()
    est = lambda bb: _vmem_estimate(bb, T, n_in, n_out, n_head, n_key, n_value)
    if batch_block is None:
        batch_block = _pick_batch_block(B, T, row_target, est, vmem_cap // 2)
    assert B % batch_block == 0, (B, batch_block)
    vmem_limit = int(min(3 * vmem_cap // 4, max(32 * 2 ** 20, 4 * est(batch_block))))
    common = dict(n_head=n_head, n_key=n_key, n_value=n_value,
                  batch_block=batch_block, vmem_limit=vmem_limit)
    try:
        return jax.block_until_ready(
            _mha_impl(x_ncw, params, single_buffer_weights=True, **common))
    except Exception:
        # fall back to default double-buffered resident operands if Buffered(1) is rejected
        return jax.block_until_ready(
            _mha_impl(x_ncw, params, single_buffer_weights=False, **common))


def ref_forward(x, params, *, n_head, n_key, n_value):
    """Pure-JAX (f32) mirror of the PyTorch forward, for correctness checking."""
    W_pos, b_pos, W_out, b_out = (params[k] for k in ("W_pos", "b_pos", "W_out", "b_out"))
    B, n_in, T = x.shape
    S = 2 * n_key + n_value
    qkv = jnp.einsum("oi,bit->bot", W_pos, x) + b_pos[None, :, None]
    qkv = qkv.reshape(B, n_head, S, T)
    q = qkv[:, :, :n_key, :] / math.sqrt(n_key)
    k = qkv[:, :, n_key:2 * n_key, :]
    v = qkv[:, :, 2 * n_key:, :]
    scores = jnp.einsum("bidt,bjdt->btij", q, k)                              # (B,T,H,H)
    attn = jax.nn.softmax(scores, axis=1)                                     # softmax over time
    context = jnp.einsum("btij,bjdt->btid", attn, v)                          # (B,T,H,nv)
    context = jnp.transpose(context, (0, 2, 3, 1)).reshape(B, n_head * n_value, T)
    return jnp.einsum("oc,bct->bot", W_out, context) + b_out[None, :, None]


if __name__ == "__main__":
    B, n_in, n_head, T = 4, 32, 4, 8
    n_key = n_value = n_in // n_head
    n_out = n_in

    key = jax.random.PRNGKey(0)
    k1, k2, k3, k4, k5 = jax.random.split(key, 5)
    params = {
        "W_pos": 0.1 * jax.random.normal(k1, (n_head * (2 * n_key + n_value), n_in), jnp.float32),
        "b_pos": 0.1 * jax.random.normal(k2, (n_head * (2 * n_key + n_value),), jnp.float32),
        "W_out": 0.1 * jax.random.normal(k3, (n_out, n_head * n_value), jnp.float32),
        "b_out": 0.1 * jax.random.normal(k4, (n_out,), jnp.float32),
    }
    x = jax.random.normal(k5, (B, n_in, T), jnp.float32)                      # NCW like PyTorch

    ref = ref_forward(x, params, n_head=n_head, n_key=n_key, n_value=n_value)

    # Default: generation-aware batch packing (>=2 parallel grid steps here).
    out = multi_head_attention(x, params, n_head=n_head, n_key=n_key, n_value=n_value)
    out = jax.block_until_ready(out)
    assert out.shape == (B, n_out, T), out.shape
    err = float(jnp.max(jnp.abs(out - ref)))
    assert jnp.allclose(out, ref, atol=3e-2, rtol=3e-2), err   # bf16 MXU path -> looser tol

    # Also exercise the one-batch-per-step path.
    out1 = multi_head_attention(x, params, n_head=n_head, n_key=n_key, n_value=n_value,
                                batch_block=1)
    out1 = jax.block_until_ready(out1)
    err1 = float(jnp.max(jnp.abs(out1 - ref)))
    assert jnp.allclose(out1, ref, atol=3e-2, rtol=3e-2), err1

    print("KERNEL_OK")
</pallas_src>

<mosaic_0001>
module attributes {stable_mosaic.version = 11 : i64} {
  func.func @_mha_kernel(%arg0: i32, %arg1: memref<2x8x32xbf16, #tpu.memory_space<vmem>>, %arg2: memref<32x96xbf16, #tpu.memory_space<vmem>>, %arg3: memref<1x96xf32, #tpu.memory_space<vmem>>, %arg4: memref<32x128xbf16, #tpu.memory_space<vmem>>, %arg5: memref<128x16xbf16, #tpu.memory_space<vmem>>, %arg6: memref<16x128xbf16, #tpu.memory_space<vmem>>, %arg7: memref<128x32xbf16, #tpu.memory_space<vmem>>, %arg8: memref<32x32xbf16, #tpu.memory_space<vmem>>, %arg9: memref<1x32xf32, #tpu.memory_space<vmem>>, %arg10: memref<2x8x32xf32, #tpu.memory_space<vmem>>) attributes {dimension_semantics = [#tpu.dimension_semantics<parallel>], iteration_bounds = array<i64: 2>, scalar_prefetch = 0 : i64, scratch_operands = 0 : i64, tpu.core_type = #tpu.core_type<tc>, window_params = [{transform_indices = @transform_0, window_bounds = array<i64: 2, 8, 32>}, {pipeline_mode = #tpu.pipeline_mode<synchronous>, transform_indices = @transform_1, window_bounds = array<i64: 32, 96>}, {pipeline_mode = #tpu.pipeline_mode<synchronous>, transform_indices = @transform_2, window_bounds = array<i64: 1, 96>}, {pipeline_mode = #tpu.pipeline_mode<synchronous>, transform_indices = @transform_3, window_bounds = array<i64: 32, 128>}, {pipeline_mode = #tpu.pipeline_mode<synchronous>, transform_indices = @transform_4, window_bounds = array<i64: 128, 16>}, {pipeline_mode = #tpu.pipeline_mode<synchronous>, transform_indices = @transform_5, window_bounds = array<i64: 16, 128>}, {pipeline_mode = #tpu.pipeline_mode<synchronous>, transform_indices = @transform_6, window_bounds = array<i64: 128, 32>}, {pipeline_mode = #tpu.pipeline_mode<synchronous>, transform_indices = @transform_7, window_bounds = array<i64: 32, 32>}, {pipeline_mode = #tpu.pipeline_mode<synchronous>, transform_indices = @transform_8, window_bounds = array<i64: 1, 32>}, {transform_indices = @transform_9, window_bounds = array<i64: 2, 8, 32>}]} {
    %c0 = arith.constant 0 : index
    %c0_0 = arith.constant 0 : index
    %c0_1 = arith.constant 0 : index
    %0 = vector.load %arg1[%c0, %c0_0, %c0_1] : memref<2x8x32xbf16, #tpu.memory_space<vmem>>, vector<2x8x32xbf16>
    %1 = vector.shape_cast %0 : vector<2x8x32xbf16> to vector<16x32xbf16>
    %c0_2 = arith.constant 0 : index
    %c0_3 = arith.constant 0 : index
    %2 = vector.load %arg2[%c0_2, %c0_3] : memref<32x96xbf16, #tpu.memory_space<vmem>>, vector<32x96xbf16>
    %cst = arith.constant dense<0.000000e+00> : vector<16x96xf32>
    %3 = tpu.matmul %1, %2, %cst {dimension_numbers = #tpu.dot_dimension_numbers<[1], [0], [0], [1], [0, 0, 1, 1], [], []>} : vector<16x32xbf16>, vector<32x96xbf16>, vector<16x96xf32> -> vector<16x96xf32>
    %c0_4 = arith.constant 0 : index
    %c0_5 = arith.constant 0 : index
    %4 = vector.load %arg3[%c0_4, %c0_5] : memref<1x96xf32, #tpu.memory_space<vmem>>, vector<1x96xf32>
    %5 = vector.broadcast %4 : vector<1x96xf32> to vector<16x96xf32>
    %6 = arith.addf %3, %5 : vector<16x96xf32>
    %7 = vector.extract_strided_slice %6 {offsets = [0, 0], sizes = [16, 32], strides = [1, 1]} : vector<16x96xf32> to vector<16x32xf32>
    %8 = vector.extract_strided_slice %6 {offsets = [0, 32], sizes = [16, 32], strides = [1, 1]} : vector<16x96xf32> to vector<16x32xf32>
    %9 = vector.extract_strided_slice %6 {offsets = [0, 64], sizes = [16, 32], strides = [1, 1]} : vector<16x96xf32> to vector<16x32xf32>
    %10 = arith.truncf %7 : vector<16x32xf32> to vector<16x32xbf16>
    %c0_6 = arith.constant 0 : index
    %c0_7 = arith.constant 0 : index
    %11 = vector.load %arg4[%c0_6, %c0_7] : memref<32x128xbf16, #tpu.memory_space<vmem>>, vector<32x128xbf16>
    %cst_8 = arith.constant dense<0.000000e+00> : vector<16x128xf32>
    %12 = tpu.matmul %10, %11, %cst_8 {dimension_numbers = #tpu.dot_dimension_numbers<[1], [0], [0], [1], [0, 0, 1, 1], [], []>} : vector<16x32xbf16>, vector<32x128xbf16>, vector<16x128xf32> -> vector<16x128xf32>
    %13 = tpu.concatenate %8, %8, %8, %8 in 1 : vector<16x32xf32>, vector<16x32xf32>, vector<16x32xf32>, vector<16x32xf32> -> vector<16x128xf32>
    %14 = arith.mulf %12, %13 : vector<16x128xf32>
    %15 = arith.truncf %14 : vector<16x128xf32> to vector<16x128xbf16>
    %c0_9 = arith.constant 0 : index
    %c0_10 = arith.constant 0 : index
    %16 = vector.load %arg5[%c0_9, %c0_10] : memref<128x16xbf16, #tpu.memory_space<vmem>>, vector<128x16xbf16>
    %cst_11 = arith.constant dense<0.000000e+00> : vector<16x16xf32>
    %17 = tpu.matmul %15, %16, %cst_11 {dimension_numbers = #tpu.dot_dimension_numbers<[1], [0], [0], [1], [0, 0, 1, 1], [], []>} : vector<16x128xbf16>, vector<128x16xbf16>, vector<16x16xf32> -> vector<16x16xf32>
    %18 = vector.shape_cast %17 : vector<16x16xf32> to vector<2x8x16xf32>
    %cst_12 = arith.constant dense<0xFF800000> : vector<2x16xf32>
    %19 = vector.multi_reduction <maximumf>, %18, %cst_12 [1] : vector<2x8x16xf32> to vector<2x16xf32>
    %20 = vector.shape_cast %19 : vector<2x16xf32> to vector<2x1x16xf32>
    %21 = vector.broadcast %20 : vector<2x1x16xf32> to vector<2x8x16xf32>
    %22 = arith.subf %18, %21 : vector<2x8x16xf32>
    %23 = math.exp %22 : vector<2x8x16xf32>
    %cst_13 = arith.constant dense<0.000000e+00> : vector<2x16xf32>
    %24 = vector.multi_reduction <add>, %23, %cst_13 [1] : vector<2x8x16xf32> to vector<2x16xf32>
    %25 = vector.shape_cast %24 : vector<2x16xf32> to vector<2x1x16xf32>
    %26 = tpu.reciprocal %25 {approx = true} : vector<2x1x16xf32> -> vector<2x1x16xf32>
    %27 = vector.broadcast %26 : vector<2x1x16xf32> to vector<2x8x16xf32>
    %28 = arith.mulf %23, %27 : vector<2x8x16xf32>
    %29 = vector.shape_cast %28 : vector<2x8x16xf32> to vector<16x16xf32>
    %30 = arith.truncf %29 : vector<16x16xf32> to vector<16x16xbf16>
    %c0_14 = arith.constant 0 : index
    %c0_15 = arith.constant 0 : index
    %31 = vector.load %arg6[%c0_14, %c0_15] : memref<16x128xbf16, #tpu.memory_space<vmem>>, vector<16x128xbf16>
    %cst_16 = arith.constant dense<0.000000e+00> : vector<16x128xf32>
    %32 = tpu.matmul %30, %31, %cst_16 {dimension_numbers = #tpu.dot_dimension_numbers<[1], [0], [0], [1], [0, 0, 1, 1], [], []>} : vector<16x16xbf16>, vector<16x128xbf16>, vector<16x128xf32> -> vector<16x128xf32>
    %33 = tpu.concatenate %9, %9, %9, %9 in 1 : vector<16x32xf32>, vector<16x32xf32>, vector<16x32xf32>, vector<16x32xf32> -> vector<16x128xf32>
    %34 = arith.mulf %32, %33 : vector<16x128xf32>
    %35 = arith.truncf %34 : vector<16x128xf32> to vector<16x128xbf16>
    %c0_17 = arith.constant 0 : index
    %c0_18 = arith.constant 0 : index
    %36 = vector.load %arg7[%c0_17, %c0_18] : memref<128x32xbf16, #tpu.memory_space<vmem>>, vector<128x32xbf16>
    %cst_19 = arith.constant dense<0.000000e+00> : vector<16x32xf32>
    %37 = tpu.matmul %35, %36, %cst_19 {dimension_numbers = #tpu.dot_dimension_numbers<[1], [0], [0], [1], [0, 0, 1, 1], [], []>} : vector<16x128xbf16>, vector<128x32xbf16>, vector<16x32xf32> -> vector<16x32xf32>
    %38 = arith.truncf %37 : vector<16x32xf32> to vector<16x32xbf16>
    %c0_20 = arith.constant 0 : index
    %c0_21 = arith.constant 0 : index
    %39 = vector.load %arg8[%c0_20, %c0_21] : memref<32x32xbf16, #tpu.memory_space<vmem>>, vector<32x32xbf16>
    %cst_22 = arith.constant dense<0.000000e+00> : vector<16x32xf32>
    %40 = tpu.matmul %38, %39, %cst_22 {dimension_numbers = #tpu.dot_dimension_numbers<[1], [0], [0], [1], [0, 0, 1, 1], [], []>} : vector<16x32xbf16>, vector<32x32xbf16>, vector<16x32xf32> -> vector<16x32xf32>
    %c0_23 = arith.constant 0 : index
    %c0_24 = arith.constant 0 : index
    %41 = vector.load %arg9[%c0_23, %c0_24] : memref<1x32xf32, #tpu.memory_space<vmem>>, vector<1x32xf32>
    %42 = vector.broadcast %41 : vector<1x32xf32> to vector<16x32xf32>
    %43 = arith.addf %40, %42 : vector<16x32xf32>
    %44 = vector.shape_cast %43 : vector<16x32xf32> to vector<2x8x32xf32>
    %c0_25 = arith.constant 0 : index
    %c0_26 = arith.constant 0 : index
    %c0_27 = arith.constant 0 : index
    %45 = vector.load %arg10[%c0_25, %c0_26, %c0_27] : memref<2x8x32xf32, #tpu.memory_space<vmem>>, vector<2x8x32xf32>
    tpu.vector_store %arg10[%c0_25, %c0_26, %c0_27], %44 {strides = array<i32>} : memref<2x8x32xf32, #tpu.memory_space<vmem>>, vector<2x8x32xf32>,
    return
  }
  func.func @transform_0(%arg0: i32) -> (i32, i32, i32) {
    %c0_i32 = arith.constant 0 : i32
    %c0_i32_0 = arith.constant 0 : i32
    %c0_i32_1 = arith.constant 0 : i32
    return %arg0, %c0_i32, %c0_i32_0 : i32, i32, i32
  }
  func.func @transform_1(%arg0: i32) -> (i32, i32) {
    %c0_i32 = arith.constant 0 : i32
    %c0_i32_0 = arith.constant 0 : i32
    %c0_i32_1 = arith.constant 0 : i32
    return %c0_i32, %c0_i32_0 : i32, i32
  }
  func.func @transform_2(%arg0: i32) -> (i32, i32) {
    %c0_i32 = arith.constant 0 : i32
    %c0_i32_0 = arith.constant 0 : i32
    %c0_i32_1 = arith.constant 0 : i32
    return %c0_i32, %c0_i32_0 : i32, i32
  }
  func.func @transform_3(%arg0: i32) -> (i32, i32) {
    %c0_i32 = arith.constant 0 : i32
    %c0_i32_0 = arith.constant 0 : i32
    %c0_i32_1 = arith.constant 0 : i32
    return %c0_i32, %c0_i32_0 : i32, i32
  }
  func.func @transform_4(%arg0: i32) -> (i32, i32) {
    %c0_i32 = arith.constant 0 : i32
    %c0_i32_0 = arith.constant 0 : i32
    %c0_i32_1 = arith.constant 0 : i32
    return %c0_i32, %c0_i32_0 : i32, i32
  }
  func.func @transform_5(%arg0: i32) -> (i32, i32) {
    %c0_i32 = arith.constant 0 : i32
    %c0_i32_0 = arith.constant 0 : i32
    %c0_i32_1 = arith.constant 0 : i32
    return %c0_i32, %c0_i32_0 : i32, i32
  }
  func.func @transform_6(%arg0: i32) -> (i32, i32) {
    %c0_i32 = arith.constant 0 : i32
    %c0_i32_0 = arith.constant 0 : i32
    %c0_i32_1 = arith.constant 0 : i32
    return %c0_i32, %c0_i32_0 : i32, i32
  }
  func.func @transform_7(%arg0: i32) -> (i32, i32) {
    %c0_i32 = arith.constant 0 : i32
    %c0_i32_0 = arith.constant 0 : i32
    %c0_i32_1 = arith.constant 0 : i32
    return %c0_i32, %c0_i32_0 : i32, i32
  }
  func.func @transform_8(%arg0: i32) -> (i32, i32) {
    %c0_i32 = arith.constant 0 : i32
    %c0_i32_0 = arith.constant 0 : i32
    %c0_i32_1 = arith.constant 0 : i32
    return %c0_i32, %c0_i32_0 : i32, i32
  }
  func.func @transform_9(%arg0: i32) -> (i32, i32, i32) {
    %c0_i32 = arith.constant 0 : i32
    %c0_i32_0 = arith.constant 0 : i32
    %c0_i32_1 = arith.constant 0 : i32
    return %arg0, %c0_i32, %c0_i32_0 : i32, i32, i32
  }
}

module attributes {stable_mosaic.version = 11 : i64} {
  func.func @_mha_kernel(%arg0: i32, %arg1: memref<2x8x32xbf16, #tpu.memory_space<vmem>>, %arg2: memref<32x96xbf16, #tpu.memory_space<vmem>>, %arg3: memref<1x96xf32, #tpu.memory_space<vmem>>, %arg4: memref<32x128xbf16, #tpu.memory_space<vmem>>, %arg5: memref<128x16xbf16, #tpu.memory_space<vmem>>, %arg6: memref<16x128xbf16, #tpu.memory_space<vmem>>, %arg7: memref<128x32xbf16, #tpu.memory_space<vmem>>, %arg8: memref<32x32xbf16, #tpu.memory_space<vmem>>, %arg9: memref<1x32xf32, #tpu.memory_space<vmem>>, %arg10: memref<2x8x32xf32, #tpu.memory_space<vmem>>) attributes {dimension_semantics = [#tpu.dimension_semantics<parallel>], iteration_bounds = array<i64: 2>, scalar_prefetch = 0 : i64, scratch_operands = 0 : i64, tpu.core_type = #tpu.core_type<tc>, window_params = [{transform_indices = @transform_0, window_bounds = array<i64: 2, 8, 32>}, {pipeline_mode = #tpu.pipeline_mode<synchronous>, transform_indices = @transform_1, window_bounds = array<i64: 32, 96>}, {pipeline_mode = #tpu.pipeline_mode<synchronous>, transform_indices = @transform_2, window_bounds = array<i64: 1, 96>}, {pipeline_mode = #tpu.pipeline_mode<synchronous>, transform_indices = @transform_3, window_bounds = array<i64: 32, 128>}, {pipeline_mode = #tpu.pipeline_mode<synchronous>, transform_indices = @transform_4, window_bounds = array<i64: 128, 16>}, {pipeline_mode = #tpu.pipeline_mode<synchronous>, transform_indices = @transform_5, window_bounds = array<i64: 16, 128>}, {pipeline_mode = #tpu.pipeline_mode<synchronous>, transform_indices = @transform_6, window_bounds = array<i64: 128, 32>}, {pipeline_mode = #tpu.pipeline_mode<synchronous>, transform_indices = @transform_7, window_bounds = array<i64: 32, 32>}, {pipeline_mode = #tpu.pipeline_mode<synchronous>, transform_indices = @transform_8, window_bounds = array<i64: 1, 32>}, {transform_indices = @transform_9, window_bounds = array<i64: 2, 8, 32>}]} {
    %c0 = arith.constant 0 : index
    %c0_0 = arith.constant 0 : index
    %c0_1 = arith.constant 0 : index
    %0 = vector.load %arg1[%c0, %c0_0, %c0_1] : memref<2x8x32xbf16, #tpu.memory_space<vmem>>, vector<2x8x32xbf16>
    %1 = vector.shape_cast %0 : vector<2x8x32xbf16> to vector<16x32xbf16>
    %c0_2 = arith.constant 0 : index
    %c0_3 = arith.constant 0 : index
    %2 = vector.load %arg2[%c0_2, %c0_3] : memref<32x96xbf16, #tpu.memory_space<vmem>>, vector<32x96xbf16>
    %cst = arith.constant dense<0.000000e+00> : vector<16x96xf32>
    %3 = tpu.matmul %1, %2, %cst {dimension_numbers = #tpu.dot_dimension_numbers<[1], [0], [0], [1], [0, 0, 1, 1], [], []>} : vector<16x32xbf16>, vector<32x96xbf16>, vector<16x96xf32> -> vector<16x96xf32>
    %c0_4 = arith.constant 0 : index
    %c0_5 = arith.constant 0 : index
    %4 = vector.load %arg3[%c0_4, %c0_5] : memref<1x96xf32, #tpu.memory_space<vmem>>, vector<1x96xf32>
    %5 = vector.broadcast %4 : vector<1x96xf32> to vector<16x96xf32>
    %6 = arith.addf %3, %5 : vector<16x96xf32>
    %7 = vector.extract_strided_slice %6 {offsets = [0, 0], sizes = [16, 32], strides = [1, 1]} : vector<16x96xf32> to vector<16x32xf32>
    %8 = vector.extract_strided_slice %6 {offsets = [0, 32], sizes = [16, 32], strides = [1, 1]} : vector<16x96xf32> to vector<16x32xf32>
    %9 = vector.extract_strided_slice %6 {offsets = [0, 64], sizes = [16, 32], strides = [1, 1]} : vector<16x96xf32> to vector<16x32xf32>
    %10 = arith.truncf %7 : vector<16x32xf32> to vector<16x32xbf16>
    %c0_6 = arith.constant 0 : index
    %c0_7 = arith.constant 0 : index
    %11 = vector.load %arg4[%c0_6, %c0_7] : memref<32x128xbf16, #tpu.memory_space<vmem>>, vector<32x128xbf16>
    %cst_8 = arith.constant dense<0.000000e+00> : vector<16x128xf32>
    %12 = tpu.matmul %10, %11, %cst_8 {dimension_numbers = #tpu.dot_dimension_numbers<[1], [0], [0], [1], [0, 0, 1, 1], [], []>} : vector<16x32xbf16>, vector<32x128xbf16>, vector<16x128xf32> -> vector<16x128xf32>
    %13 = tpu.concatenate %8, %8, %8, %8 in 1 : vector<16x32xf32>, vector<16x32xf32>, vector<16x32xf32>, vector<16x32xf32> -> vector<16x128xf32>
    %14 = arith.mulf %12, %13 : vector<16x128xf32>
    %15 = arith.truncf %14 : vector<16x128xf32> to vector<16x128xbf16>
    %c0_9 = arith.constant 0 : index
    %c0_10 = arith.constant 0 : index
    %16 = vector.load %arg5[%c0_9, %c0_10] : memref<128x16xbf16, #tpu.memory_space<vmem>>, vector<128x16xbf16>
    %cst_11 = arith.constant dense<0.000000e+00> : vector<16x16xf32>
    %17 = tpu.matmul %15, %16, %cst_11 {dimension_numbers = #tpu.dot_dimension_numbers<[1], [0], [0], [1], [0, 0, 1, 1], [], []>} : vector<16x128xbf16>, vector<128x16xbf16>, vector<16x16xf32> -> vector<16x16xf32>
    %18 = vector.shape_cast %17 : vector<16x16xf32> to vector<2x8x16xf32>
    %cst_12 = arith.constant dense<0xFF800000> : vector<2x16xf32>
    %19 = vector.multi_reduction <maximumf>, %18, %cst_12 [1] : vector<2x8x16xf32> to vector<2x16xf32>
    %20 = vector.shape_cast %19 : vector<2x16xf32> to vector<2x1x16xf32>
    %21 = vector.broadcast %20 : vector<2x1x16xf32> to vector<2x8x16xf32>
    %22 = arith.subf %18, %21 : vector<2x8x16xf32>
    %23 = math.exp %22 : vector<2x8x16xf32>
    %cst_13 = arith.constant dense<0.000000e+00> : vector<2x16xf32>
    %24 = vector.multi_reduction <add>, %23, %cst_13 [1] : vector<2x8x16xf32> to vector<2x16xf32>
    %25 = vector.shape_cast %24 : vector<2x16xf32> to vector<2x1x16xf32>
    %26 = tpu.reciprocal %25 {approx = true} : vector<2x1x16xf32> -> vector<2x1x16xf32>
    %27 = vector.broadcast %26 : vector<2x1x16xf32> to vector<2x8x16xf32>
    %28 = arith.mulf %23, %27 : vector<2x8x16xf32>
    %29 = vector.shape_cast %28 : vector<2x8x16xf32> to vector<16x16xf32>
    %30 = arith.truncf %29 : vector<16x16xf32> to vector<16x16xbf16>
    %c0_14 = arith.constant 0 : index
    %c0_15 = arith.constant 0 : index
    %31 = vector.load %arg6[%c0_14, %c0_15] : memref<16x128xbf16, #tpu.memory_space<vmem>>, vector<16x128xbf16>
    %cst_16 = arith.constant dense<0.000000e+00> : vector<16x128xf32>
    %32 = tpu.matmul %30, %31, %cst_16 {dimension_numbers = #tpu.dot_dimension_numbers<[1], [0], [0], [1], [0, 0, 1, 1], [], []>} : vector<16x16xbf16>, vector<16x128xbf16>, vector<16x128xf32> -> vector<16x128xf32>
    %33 = tpu.concatenate %9, %9, %9, %9 in 1 : vector<16x32xf32>, vector<16x32xf32>, vector<16x32xf32>, vector<16x32xf32> -> vector<16x128xf32>
    %34 = arith.mulf %32, %33 : vector<16x128xf32>
    %35 = arith.truncf %34 : vector<16x128xf32> to vector<16x128xbf16>
    %c0_17 = arith.constant 0 : index
    %c0_18 = arith.constant 0 : index
    %36 = vector.load %arg7[%c0_17, %c0_18] : memref<128x32xbf16, #tpu.memory_space<vmem>>, vector<128x32xbf16>
    %cst_19 = arith.constant dense<0.000000e+00> : vector<16x32xf32>
    %37 = tpu.matmul %35, %36, %cst_19 {dimension_numbers = #tpu.dot_dimension_numbers<[1], [0], [0], [1], [0, 0, 1, 1], [], []>} : vector<16x128xbf16>, vector<128x32xbf16>, vector<16x32xf32> -> vector<16x32xf32>
    %38 = arith.truncf %37 : vector<16x32xf32> to vector<16x32xbf16>
    %c0_20 = arith.constant 0 : index
    %c0_21 = arith.constant 0 : index
    %39 = vector.load %arg8[%c0_20, %c0_21] : memref<32x32xbf16, #tpu.memory_space<vmem>>, vector<32x32xbf16>
    %cst_22 = arith.constant dense<0.000000e+00> : vector<16x32xf32>
    %40 = tpu.matmul %38, %39, %cst_22 {dimension_numbers = #tpu.dot_dimension_numbers<[1], [0], [0], [1], [0, 0, 1, 1], [], []>} : vector<16x32xbf16>, vector<32x32xbf16>, vector<16x32xf32> -> vector<16x32xf32>
    %c0_23 = arith.constant 0 : index
    %c0_24 = arith.constant 0 : index
    %41 = vector.load %arg9[%c0_23, %c0_24] : memref<1x32xf32, #tpu.memory_space<vmem>>, vector<1x32xf32>
    %42 = vector.broadcast %41 : vector<1x32xf32> to vector<16x32xf32>
    %43 = arith.addf %40, %42 : vector<16x32xf32>
    %44 = vector.shape_cast %43 : vector<16x32xf32> to vector<2x8x32xf32>
    %c0_25 = arith.constant 0 : index
    %c0_26 = arith.constant 0 : index
    %c0_27 = arith.constant 0 : index
    %45 = vector.load %arg10[%c0_25, %c0_26, %c0_27] : memref<2x8x32xf32, #tpu.memory_space<vmem>>, vector<2x8x32xf32>
    tpu.vector_store %arg10[%c0_25, %c0_26, %c0_27], %44 {strides = array<i32>} : memref<2x8x32xf32, #tpu.memory_space<vmem>>, vector<2x8x32xf32>,
    return
  }
  func.func @transform_0(%arg0: i32) -> (i32, i32, i32) {
    %c0_i32 = arith.constant 0 : i32
    %c0_i32_0 = arith.constant 0 : i32
    %c0_i32_1 = arith.constant 0 : i32
    return %arg0, %c0_i32, %c0_i32_0 : i32, i32, i32
  }
  func.func @transform_1(%arg0: i32) -> (i32, i32) {
    %c0_i32 = arith.constant 0 : i32
    %c0_i32_0 = arith.constant 0 : i32
    %c0_i32_1 = arith.constant 0 : i32
    return %c0_i32, %c0_i32_0 : i32, i32
  }
  func.func @transform_2(%arg0: i32) -> (i32, i32) {
    %c0_i32 = arith.constant 0 : i32
    %c0_i32_0 = arith.constant 0 : i32
    %c0_i32_1 = arith.constant 0 : i32
    return %c0_i32, %c0_i32_0 : i32, i32
  }
  func.func @transform_3(%arg0: i32) -> (i32, i32) {
    %c0_i32 = arith.constant 0 : i32
    %c0_i32_0 = arith.constant 0 : i32
    %c0_i32_1 = arith.constant 0 : i32
    return %c0_i32, %c0_i32_0 : i32, i32
  }
  func.func @transform_4(%arg0: i32) -> (i32, i32) {
    %c0_i32 = arith.constant 0 : i32
    %c0_i32_0 = arith.constant 0 : i32
    %c0_i32_1 = arith.constant 0 : i32
    return %c0_i32, %c0_i32_0 : i32, i32
  }
  func.func @transform_5(%arg0: i32) -> (i32, i32) {
    %c0_i32 = arith.constant 0 : i32
    %c0_i32_0 = arith.constant 0 : i32
    %c0_i32_1 = arith.constant 0 : i32
    return %c0_i32, %c0_i32_0 : i32, i32
  }
  func.func @transform_6(%arg0: i32) -> (i32, i32) {
    %c0_i32 = arith.constant 0 : i32
    %c0_i32_0 = arith.constant 0 : i32
    %c0_i32_1 = arith.constant 0 : i32
    return %c0_i32, %c0_i32_0 : i32, i32
  }
  func.func @transform_7(%arg0: i32) -> (i32, i32) {
    %c0_i32 = arith.constant 0 : i32
    %c0_i32_0 = arith.constant 0 : i32
    %c0_i32_1 = arith.constant 0 : i32
    return %c0_i32, %c0_i32_0 : i32, i32
  }
  func.func @transform_8(%arg0: i32) -> (i32, i32) {
    %c0_i32 = arith.constant 0 : i32
    %c0_i32_0 = arith.constant 0 : i32
    %c0_i32_1 = arith.constant 0 : i32
    return %c0_i32, %c0_i32_0 : i32, i32
  }
  func.func @transform_9(%arg0: i32) -> (i32, i32, i32) {
    %c0_i32 = arith.constant 0 : i32
    %c0_i32_0 = arith.constant 0 : i32
    %c0_i32_1 = arith.constant 0 : i32
    return %arg0, %c0_i32, %c0_i32_0 : i32, i32, i32
  }
}

</mosaic_0001>

<llo_original>
// kernel: _mha_impl.1
$region0: #{_mha_impl.1}
  #allocation0 [shape = 'u32[]', space=smem, size = 0x4, offset = 0x4, fixed_abs, tag = 'smem constant byte address 0x4 - core index']
  #allocation1 [shape = 'u32[144,128]{1,0:T(1,128)}', space=vmem, size = 0x12000, scoped, tag = 'internal scratch']
  %s0 = inlined_call_operand.vmem [shape: bf16[4,8,32], index: 0, kind: input, shape index: {}]
  %s1 = inlined_call_operand.vmem [shape: bf16[32,96], index: 1, kind: input, shape index: {}]
  %s2 = inlined_call_operand.vmem [shape: f32[1,96], index: 2, kind: input, shape index: {}]
  %s3 = inlined_call_operand.vmem [shape: bf16[32,128], index: 3, kind: input, shape index: {}]
  %s4 = inlined_call_operand.vmem [shape: bf16[128,16], index: 4, kind: input, shape index: {}]
  %s5 = inlined_call_operand.vmem [shape: bf16[16,128], index: 5, kind: input, shape index: {}]
  %s6 = inlined_call_operand.vmem [shape: bf16[128,32], index: 6, kind: input, shape index: {}]
  %s7 = inlined_call_operand.vmem [shape: bf16[32,32], index: 7, kind: input, shape index: {}]
  %s8 = inlined_call_operand.vmem [shape: f32[1,32], index: 8, kind: input, shape index: {}]
  %s9 = inlined_call_operand.hbm [shape: f32[4,8,32], index: 9, kind: output, shape index: {}]
  %s10 = sld [smem:[#allocation0]]
  $region69: #{_mha_impl.1} parent=0
    _
  %s12 = ssub.s32 1, %s10
  %s13 = scalar_select 0, %s12, %s10
  $region1: #{_mha_impl.1} parent=0
    #allocation2 [shape = 'u8[16384]{0}', space=vmem, size = 0x4000, scoped, tag = 'output window, operand 0']
    #allocation3 [shape = 's32[2]{0}', space=sflag, size = 0x8, scoped, tag = 'scoped memory for _mha_impl.1']
    %14 = vsyncpa [#allocation3], 0
    %s15 = scalar_lea.sflag [#allocation3], 1
    %16 = vsyncpa %s15, 0
    loop: start=0, step=1, limit=4
    $region2: #{_mha_impl.1} parent=1 // loop_pre_header
      _
    $region3: #{_mha_impl.1} parent=1 // loop_header
      %s18 = sphi 0, %s22
      %p19 = scmp.ge.s32.totalorder %s18, 4
      %s28 = sphi 0, %s30
      %s31 = sphi 0, %s28
      %s32 = sphi 0, %s31
      %s48 = sphi 0, %s32
      %s52 = sphi 0, %s52
      %s54 = sphi 0, %s52
      %s55 = sphi 0, %s54
      %s69 = sphi 0, %s55
      %s73 = sphi 0, %s73
      %s75 = sphi 0, %s73
      %s76 = sphi 0, %s75
      %s90 = sphi 0, %s76
      %s94 = sphi 0, %s94
      %s96 = sphi 0, %s94
      %s97 = sphi 0, %s96
      %s111 = sphi 0, %s97
      %s115 = sphi 0, %s115
      %s117 = sphi 0, %s115
      %s118 = sphi 0, %s117
      %s132 = sphi 0, %s118
      %s136 = sphi 0, %s136
      %s138 = sphi 0, %s136
      %s139 = sphi 0, %s138
      %s153 = sphi 0, %s139
      %s157 = sphi 0, %s157
      %s159 = sphi 0, %s157
      %s160 = sphi 0, %s159
      %s174 = sphi 0, %s160
      %s178 = sphi 0, %s178
      %s180 = sphi 0, %s178
      %s181 = sphi 0, %s180
      %s195 = sphi 0, %s181
      %s199 = sphi 0, %s199
      %s201 = sphi 0, %s199
      %s202 = sphi 0, %s201
      %s216 = sphi 0, %s202
      %s222 = sphi 0, %s224
      %s225 = sphi 0, %s222
      %s226 = sphi 0, %s225
      %s242 = sphi 0, %s226
    $region4: #{_mha_impl.1} parent=1 // loop_header_branch
      %21 = sbr.rel (%p19) target = $region8
    $region5: #{_mha_impl.1} parent=1 // loop_body
      %s23 = ssub.s32 %s18, 1
      %s24 = ssub.s32 %s18, 2
      %s25 = sadd.s32 %s18, 1
      %s26 = ssub.s32 %s18, %s25
      %p27 = scmp.eq.s32.totalorder %s26, 0
      %s29 = sadd.s32 %s28, 1
      %s30 = scalar_select %p27, %s28, %s29
      %p33 = pneg %p27
      %p34 = scmp.eq.s32.totalorder %s18, 1
      %p35 = por %p33, %p34
      %p36 = scmp.ne.s32.totalorder %s28, %s31
      %p37 = scmp.eq.s32.totalorder %s18, 0
      %p38 = por %p36, %p37
      %p39 = scmp.ne.s32.totalorder %s28, %s31
      %p40 = scmp.eq.s32.totalorder %s23, 1
      %p41 = por %p39, %p40
      %p42 = scmp.ne.s32.totalorder %s31, %s32
      %p43 = scmp.eq.s32.totalorder %s23, 0
      %p44 = por %p42, %p43
      %p45 = scmp.ne.s32.totalorder %s31, %s32
      %p46 = scmp.eq.s32.totalorder %s24, 1
      %p47 = por %p45, %p46
      %p49 = scmp.ne.s32.totalorder %s32, %s48
      %p50 = scmp.eq.s32.totalorder %s24, 0
      %p51 = por %p49, %p50
      %s53 = sadd.s32 %s52, 1
      %p56 = scmp.eq.s32.totalorder %s18, 1
      %p57 = scmp.ne.s32.totalorder %s52, %s54
      %p58 = scmp.eq.s32.totalorder %s18, 0
      %p59 = por %p57, %p58
      %p60 = scmp.ne.s32.totalorder %s52, %s54
      %p61 = scmp.eq.s32.totalorder %s23, 1
      %p62 = por %p60, %p61
      %p63 = scmp.ne.s32.totalorder %s54, %s55
      %p64 = scmp.eq.s32.totalorder %s23, 0
      %p65 = por %p63, %p64
      %p66 = scmp.ne.s32.totalorder %s54, %s55
      %p67 = scmp.eq.s32.totalorder %s24, 1
      %p68 = por %p66, %p67
      %p70 = scmp.ne.s32.totalorder %s55, %s69
      %p71 = scmp.eq.s32.totalorder %s24, 0
      %p72 = por %p70, %p71
      %s74 = sadd.s32 %s73, 1
      %p77 = scmp.eq.s32.totalorder %s18, 1
      %p78 = scmp.ne.s32.totalorder %s73, %s75
      %p79 = scmp.eq.s32.totalorder %s18, 0
      %p80 = por %p78, %p79
      %p81 = scmp.ne.s32.totalorder %s73, %s75
      %p82 = scmp.eq.s32.totalorder %s23, 1
      %p83 = por %p81, %p82
      %p84 = scmp.ne.s32.totalorder %s75, %s76
      %p85 = scmp.eq.s32.totalorder %s23, 0
      %p86 = por %p84, %p85
      %p87 = scmp.ne.s32.totalorder %s75, %s76
      %p88 = scmp.eq.s32.totalorder %s24, 1
      %p89 = por %p87, %p88
      %p91 = scmp.ne.s32.totalorder %s76, %s90
      %p92 = scmp.eq.s32.totalorder %s24, 0
      %p93 = por %p91, %p92
      %s95 = sadd.s32 %s94, 1
      %p98 = scmp.eq.s32.totalorder %s18, 1
      %p99 = scmp.ne.s32.totalorder %s94, %s96
      %p100 = scmp.eq.s32.totalorder %s18, 0
      %p101 = por %p99, %p100
      %p102 = scmp.ne.s32.totalorder %s94, %s96
      %p103 = scmp.eq.s32.totalorder %s23, 1
      %p104 = por %p102, %p103
      %p105 = scmp.ne.s32.totalorder %s96, %s97
      %p106 = scmp.eq.s32.totalorder %s23, 0
      %p107 = por %p105, %p106
      %p108 = scmp.ne.s32.totalorder %s96, %s97
      %p109 = scmp.eq.s32.totalorder %s24, 1
      %p110 = por %p108, %p109
      %p112 = scmp.ne.s32.totalorder %s97, %s111
      %p113 = scmp.eq.s32.totalorder %s24, 0
      %p114 = por %p112, %p113
      %s116 = sadd.s32 %s115, 1
      %p119 = scmp.eq.s32.totalorder %s18, 1
      %p120 = scmp.ne.s32.totalorder %s115, %s117
      %p121 = scmp.eq.s32.totalorder %s18, 0
      %p122 = por %p120, %p121
      %p123 = scmp.ne.s32.totalorder %s115, %s117
      %p124 = scmp.eq.s32.totalorder %s23, 1
      %p125 = por %p123, %p124
      %p126 = scmp.ne.s32.totalorder %s117, %s118
      %p127 = scmp.eq.s32.totalorder %s23, 0
      %p128 = por %p126, %p127
      %p129 = scmp.ne.s32.totalorder %s117, %s118
      %p130 = scmp.eq.s32.totalorder %s24, 1
      %p131 = por %p129, %p130
      %p133 = scmp.ne.s32.totalorder %s118, %s132
      %p134 = scmp.eq.s32.totalorder %s24, 0
      %p135 = por %p133, %p134
      %s137 = sadd.s32 %s136, 1
      %p140 = scmp.eq.s32.totalorder %s18, 1
      %p141 = scmp.ne.s32.totalorder %s136, %s138
      %p142 = scmp.eq.s32.totalorder %s18, 0
      %p143 = por %p141, %p142
      %p144 = scmp.ne.s32.totalorder %s136, %s138
      %p145 = scmp.eq.s32.totalorder %s23, 1
      %p146 = por %p144, %p145
      %p147 = scmp.ne.s32.totalorder %s138, %s139
      %p148 = scmp.eq.s32.totalorder %s23, 0
      %p149 = por %p147, %p148
      %p150 = scmp.ne.s32.totalorder %s138, %s139
      %p151 = scmp.eq.s32.totalorder %s24, 1
      %p152 = por %p150, %p151
      %p154 = scmp.ne.s32.totalorder %s139, %s153
      %p155 = scmp.eq.s32.totalorder %s24, 0
      %p156 = por %p154, %p155
      %s158 = sadd.s32 %s157, 1
      %p161 = scmp.eq.s32.totalorder %s18, 1
      %p162 = scmp.ne.s32.totalorder %s157, %s159
      %p163 = scmp.eq.s32.totalorder %s18, 0
      %p164 = por %p162, %p163
      %p165 = scmp.ne.s32.totalorder %s157, %s159
      %p166 = scmp.eq.s32.totalorder %s23, 1
      %p167 = por %p165, %p166
      %p168 = scmp.ne.s32.totalorder %s159, %s160
      %p169 = scmp.eq.s32.totalorder %s23, 0
      %p170 = por %p168, %p169
      %p171 = scmp.ne.s32.totalorder %s159, %s160
      %p172 = scmp.eq.s32.totalorder %s24, 1
      %p173 = por %p171, %p172
      %p175 = scmp.ne.s32.totalorder %s160, %s174
      %p176 = scmp.eq.s32.totalorder %s24, 0
      %p177 = por %p175, %p176
      %s179 = sadd.s32 %s178, 1
      %p182 = scmp.eq.s32.totalorder %s18, 1
      %p183 = scmp.ne.s32.totalorder %s178, %s180
      %p184 = scmp.eq.s32.totalorder %s18, 0
      %p185 = por %p183, %p184
      %p186 = scmp.ne.s32.totalorder %s178, %s180
      %p187 = scmp.eq.s32.totalorder %s23, 1
      %p188 = por %p186, %p187
      %p189 = scmp.ne.s32.totalorder %s180, %s181
      %p190 = scmp.eq.s32.totalorder %s23, 0
      %p191 = por %p189, %p190
      %p192 = scmp.ne.s32.totalorder %s180, %s181
      %p193 = scmp.eq.s32.totalorder %s24, 1
      %p194 = por %p192, %p193
      %p196 = scmp.ne.s32.totalorder %s181, %s195
      %p197 = scmp.eq.s32.totalorder %s24, 0
      %p198 = por %p196, %p197
      %s200 = sadd.s32 %s199, 1
      %p203 = scmp.eq.s32.totalorder %s18, 1
      %p204 = scmp.ne.s32.totalorder %s199, %s201
      %p205 = scmp.eq.s32.totalorder %s18, 0
      %p206 = por %p204, %p205
      %p207 = scmp.ne.s32.totalorder %s199, %s201
      %p208 = scmp.eq.s32.totalorder %s23, 1
      %p209 = por %p207, %p208
      %p210 = scmp.ne.s32.totalorder %s201, %s202
      %p211 = scmp.eq.s32.totalorder %s23, 0
      %p212 = por %p210, %p211
      %p213 = scmp.ne.s32.totalorder %s201, %s202
      %p214 = scmp.eq.s32.totalorder %s24, 1
      %p215 = por %p213, %p214
      %p217 = scmp.ne.s32.totalorder %s202, %s216
      %p218 = scmp.eq.s32.totalorder %s24, 0
      %p219 = por %p217, %p218
      %s220 = ssub.s32 %s18, %s25
      %p221 = scmp.eq.s32.totalorder %s220, 0
      %s223 = sadd.s32 %s222, 1
      %s224 = scalar_select %p221, %s222, %s223
      %p227 = pneg %p221
      %p228 = scmp.eq.s32.totalorder %s18, 1
      %p229 = por %p227, %p228
      %p230 = scmp.ne.s32.totalorder %s222, %s225
      %p231 = scmp.eq.s32.totalorder %s18, 0
      %p232 = por %p230, %p231
      %p233 = scmp.ne.s32.totalorder %s222, %s225
      %p234 = scmp.eq.s32.totalorder %s23, 1
      %p235 = por %p233, %p234
      %p236 = scmp.ne.s32.totalorder %s225, %s226
      %p237 = scmp.eq.s32.totalorder %s23, 0
      %p238 = por %p236, %p237
      %p239 = scmp.ne.s32.totalorder %s225, %s226
      %p240 = scmp.eq.s32.totalorder %s24, 1
      %p241 = por %p239, %p240
      %p243 = scmp.ne.s32.totalorder %s226, %s242
      %p244 = scmp.eq.s32.totalorder %s24, 0
      %p245 = por %p243, %p244
      %p246 = scmp.le.s32.totalorder 1, %s18
      %p247 = scmp.lt.s32.totalorder %s18, 3
      %p248 = pnand %p246, %p247
      %p249 = pneg %p248
      // Predicated region
      $region9: #{_mha_impl.1} parent=5 // pred_check
        _
      $region10: #{_mha_impl.1} parent=5 // pred_check_branch
        %251 = sbr.rel (%p248) target = $region12
      $region11: #{_mha_impl.1} parent=5 // pred_region
        %s252 = ssub.s32 %s18, 1
        // Predicated region
        $region13: #{_mha_impl.1} parent=11 // pred_check
          %p253 = pneg %p65
        $region14: #{_mha_impl.1} parent=11 // pred_check_branch
          %255 = sbr.rel (%p253) target = $region16
        $region15: #{_mha_impl.1} parent=11 // pred_region
          _
        $region16: #{_mha_impl.1} parent=11 // pred_fallthru
          _
        // Predicated region
        $region17: #{_mha_impl.1} parent=11 // pred_check
          %p256 = pneg %p86
        $region18: #{_mha_impl.1} parent=11 // pred_check_branch
          %258 = sbr.rel (%p256) target = $region20
        $region19: #{_mha_impl.1} parent=11 // pred_region
          _
        $region20: #{_mha_impl.1} parent=11 // pred_fallthru
          _
        // Predicated region
        $region21: #{_mha_impl.1} parent=11 // pred_check
          %p259 = pneg %p107
        $region22: #{_mha_impl.1} parent=11 // pred_check_branch
          %261 = sbr.rel (%p259) target = $region24
        $region23: #{_mha_impl.1} parent=11 // pred_region
          _
        $region24: #{_mha_impl.1} parent=11 // pred_fallthru
          _
        // Predicated region
        $region25: #{_mha_impl.1} parent=11 // pred_check
          %p262 = pneg %p128
        $region26: #{_mha_impl.1} parent=11 // pred_check_branch
          %264 = sbr.rel (%p262) target = $region28
        $region27: #{_mha_impl.1} parent=11 // pred_region
          _
        $region28: #{_mha_impl.1} parent=11 // pred_fallthru
          _
        // Predicated region
        $region29: #{_mha_impl.1} parent=11 // pred_check
          %p265 = pneg %p149
        $region30: #{_mha_impl.1} parent=11 // pred_check_branch
          %267 = sbr.rel (%p265) target = $region32
        $region31: #{_mha_impl.1} parent=11 // pred_region
          _
        $region32: #{_mha_impl.1} parent=11 // pred_fallthru
          _
        // Predicated region
        $region33: #{_mha_impl.1} parent=11 // pred_check
          %p268 = pneg %p170
        $region34: #{_mha_impl.1} parent=11 // pred_check_branch
          %270 = sbr.rel (%p268) target = $region36
        $region35: #{_mha_impl.1} parent=11 // pred_region
          _
        $region36: #{_mha_impl.1} parent=11 // pred_fallthru
          _
        // Predicated region
        $region37: #{_mha_impl.1} parent=11 // pred_check
          %p271 = pneg %p191
        $region38: #{_mha_impl.1} parent=11 // pred_check_branch
          %273 = sbr.rel (%p271) target = $region40
        $region39: #{_mha_impl.1} parent=11 // pred_region
          _
        $region40: #{_mha_impl.1} parent=11 // pred_fallthru
          _
        // Predicated region
        $region41: #{_mha_impl.1} parent=11 // pred_check
          %p274 = pneg %p212
        $region42: #{_mha_impl.1} parent=11 // pred_check_branch
          %276 = sbr.rel (%p274) target = $region44
        $region43: #{_mha_impl.1} parent=11 // pred_region
          _
        $region44: #{_mha_impl.1} parent=11 // pred_fallthru
          _
      $region12: #{_mha_impl.1} parent=5 // pred_fallthru
        _
      %p277 = scmp.lt.s32.totalorder %s18, 2
      // Predicated region
      $region45: #{_mha_impl.1} parent=5 // pred_check
        %p278 = pneg %p277
      $region46: #{_mha_impl.1} parent=5 // pred_check_branch
        %280 = sbr.rel (%p278) target = $region48
      $region47: #{_mha_impl.1} parent=5 // pred_region
        // Predicated region
        $region49: #{_mha_impl.1} parent=47 // pred_check
          %p281 = pneg %p38
        $region50: #{_mha_impl.1} parent=47 // pred_check_branch
          %283 = sbr.rel (%p281) target = $region52
        $region51: #{_mha_impl.1} parent=47 // pred_region
          %s284 = smul.u32 2, %s18
          %p285 = scmp.lt.s32.totalorder %s284, 3
          %s286 = scalar_select %p285, %s284, 3
          %s287 = smul.addr %s286, 4
          %s288 = scalar_lea.vmem %s0, %s287
          %s289 = smul.u32 2, %s18
        $region52: #{_mha_impl.1} parent=47 // pred_fallthru
          _
      $region48: #{_mha_impl.1} parent=5 // pred_fallthru
        _
      %p290 = scmp.le.s32.totalorder 1, %s18
      %p291 = scmp.lt.s32.totalorder %s18, 3
      %p292 = pnand %p290, %p291
      %p293 = pneg %p292
      // Predicated region
      $region53: #{_mha_impl.1} parent=5 // pred_check
        _
      $region54: #{_mha_impl.1} parent=5 // pred_check_branch
        %295 = sbr.rel (%p292) target = $region56
      $region55: #{_mha_impl.1} parent=5 // pred_region
        %s296 = ssub.s32 %s18, 1
        %s297 = smul.u32 2, %s23
        %p298 = scmp.lt.s32.totalorder %s297, 3
        %s299 = scalar_select %p298, %s297, 3
        %s300 = smul.addr %s299, 4
        %s301 = scalar_lea.vmem %s0, %s300
        %p302 = pneg %p44
        %p303 = pneg %p41
        %p304 = pneg %p65
        %p305 = pneg %p62
        %p306 = pneg %p86
        %p307 = pneg %p83
        %p308 = pneg %p107
        %p309 = pneg %p104
        %p310 = pneg %p128
        %p311 = pneg %p125
        %p312 = pneg %p149
        %p313 = pneg %p146
        %p314 = pneg %p170
        %p315 = pneg %p167
        %p316 = pneg %p191
        %p317 = pneg %p188
        %p318 = pneg %p212
        %p319 = pneg %p209
        %p320 = pneg %p238
        %p321 = pneg %p235
        %s322 = sand.u32 %s225, 1
        %s323 = scalar_lea.sflag [#allocation3], %s322
        %s324 = sand.u32 %s225, 1
        %s325 = smul.addr %s324, 16
        %s326 = scalar_lea.vmem [#allocation2], %s325
        %s327 = smul.u32 2, %s23
        %p328 = scmp.lt.s32.totalorder %s327, 3
        %s329 = scalar_select %p328, %s327, 3
        %s330 = smul.addr %s329, 4
        %s331 = scalar_lea.vmem %s0, %s330
        %s332 = smul.u32 2, %s23
        %s333 = smul.u32 2, %s23
        %v335 = vld [vmem:[%s331] sm:$0xf]
        %v336 = vld [vmem:[%s331 + $0x4] sm:$0xf]
        %v337 = vld [vmem:[%s1] sm:$0xf]
        %v338 = vld [vmem:[%s1 + $0x4] sm:$0xf]
        %v339 = vld [vmem:[%s1 + $0x8] sm:$0xf]
        %v340 = vld [vmem:[%s1 + $0xc] sm:$0xf]
        %v341 = vld [vmem:[%s2] sm:$0x1]
        %v343 = vlaneseq
        %v344 = vshrl.u32 %v343, 7
        %v345 = vsub.s32 0, %v344
        %v346 = vrot.slane %v341, %v345
        %v350 = vunpack.c.l.b16 %v335
        %v351 = vunpack.c.l.b16 %v336
        %v352 = vpack.c.b16 %v351, %v350
        %v357 = vunpack.c.l.b16 %v337
        %v358 = vunpack.c.l.b16 %v338
        %v359 = vunpack.c.l.b16 %v339
        %v360 = vunpack.c.l.b16 %v340
        %v361 = vpack.c.b16 %v358, %v357
        %v362 = vpack.c.b16 %v360, %v359
        %vm365 = vcmask 261120
        %v367 = vsel %vm365, %v352, 0
        %369 = vmatprep.subr.bf16.mxu0 0
        %370 = vmatpush1.bf16.msra.mxu0 %v361
        %371 = vmatprep.subr.bf16.mxu0 0
        %372 = vmatpush1.bf16.msra.mxu0 %v362
        %373 = vmatprep.subr.bf16.mxu0 0
        %374 = vmatpush1.bf16.msra.mxu0 0
        %375 = vmatprep.subr.bf16.mxu0 0
        %376 = vmatpush1.bf16.msra.mxu0 0
        %377 = vmatprep.subr.bf16.mxu0 0
        %378 = vmatpush1.bf16.msra.mxu0 0
        %379 = vmatprep.subr.bf16.mxu0 0
        %380 = vmatpush1.bf16.msra.mxu0 0
        %381 = vmatprep.subr.bf16.mxu0 0
        %382 = vmatpush1.bf16.msra.mxu0 0
        %383 = vmatprep.subr.bf16.mxu0 0
        %384 = vmatpush1.bf16.msra.mxu0 0
        %385 = vmatprep.subr.bf16.mxu0 0
        %386 = vmatpush1.bf16.msra.mxu0 0
        %387 = vmatprep.subr.bf16.mxu0 0
        %388 = vmatpush1.bf16.msra.mxu0 0
        %389 = vmatprep.subr.bf16.mxu0 0
        %390 = vmatpush1.bf16.msra.mxu0 0
        %391 = vmatprep.subr.bf16.mxu0 0
        %392 = vmatpush1.bf16.msra.mxu0 0
        %393 = vmatprep.subr.bf16.mxu0 0
        %394 = vmatpush1.bf16.msra.mxu0 0
        %395 = vmatprep.subr.bf16.mxu0 0
        %396 = vmatpush1.bf16.msra.mxu0 0
        %397 = vmatprep.subr.bf16.mxu0 0
        %398 = vmatpush1.bf16.msra.mxu0 0
        %399 = vmatprep.subr.bf16.mxu0 0
        %400 = vmatpush1.bf16.msra.mxu0 0
        %401 = vmatprep.mubr.bf16.mxu0 0
        %402 = vmatmul.mubr.bf16.gmra.mrb[0].mxu0 %v367
        %v403 = vpop.f32.mrb[0].mxu0
        %v404 = vadd.f32 %v346, %v403
        %v405 = vpop.f32.mrb[0].mxu0
        %v406 = vpop.f32.mrb[0].mxu0
        %v407 = vadd.f32 %v346, %v406
        %v408 = vpop.f32.mrb[0].mxu0
        %409 = vdwg.mxu0
        %v410 = vpack.c.bf16 %v407, %v404
        %v411 = vld [vmem:[%s3] sm:$0xf]
        %v412 = vld [vmem:[%s3 + $0x4] sm:$0xf]
        %v413 = vld [vmem:[%s3 + $0x8] sm:$0xf]
        %v414 = vld [vmem:[%s3 + $0xc] sm:$0xf]
        %v419 = vunpack.c.l.b16 %v411
        %v420 = vunpack.c.l.b16 %v412
        %v421 = vunpack.c.l.b16 %v413
        %v422 = vunpack.c.l.b16 %v414
        %v423 = vpack.c.b16 %v420, %v419
        %v424 = vpack.c.b16 %v422, %v421
        %v428 = vsel %vm365, %v410, 0
        %430 = vmatprep.subr.bf16.mxu0 0
        %431 = vmatpush1.bf16.msra.mxu0 %v423
        %432 = vmatprep.subr.bf16.mxu0 0
        %433 = vmatpush1.bf16.msra.mxu0 %v424
        %434 = vmatprep.subr.bf16.mxu0 0
        %435 = vmatpush1.bf16.msra.mxu0 0
        %436 = vmatprep.subr.bf16.mxu0 0
        %437 = vmatpush1.bf16.msra.mxu0 0
        %438 = vmatprep.subr.bf16.mxu0 0
        %439 = vmatpush1.bf16.msra.mxu0 0
        %440 = vmatprep.subr.bf16.mxu0 0
        %441 = vmatpush1.bf16.msra.mxu0 0
        %442 = vmatprep.subr.bf16.mxu0 0
        %443 = vmatpush1.bf16.msra.mxu0 0
        %444 = vmatprep.subr.bf16.mxu0 0
        %445 = vmatpush1.bf16.msra.mxu0 0
        %446 = vmatprep.subr.bf16.mxu0 0
        %447 = vmatpush1.bf16.msra.mxu0 0
        %448 = vmatprep.subr.bf16.mxu0 0
        %449 = vmatpush1.bf16.msra.mxu0 0
        %450 = vmatprep.subr.bf16.mxu0 0
        %451 = vmatpush1.bf16.msra.mxu0 0
        %452 = vmatprep.subr.bf16.mxu0 0
        %453 = vmatpush1.bf16.msra.mxu0 0
        %454 = vmatprep.subr.bf16.mxu0 0
        %455 = vmatpush1.bf16.msra.mxu0 0
        %456 = vmatprep.subr.bf16.mxu0 0
        %457 = vmatpush1.bf16.msra.mxu0 0
        %458 = vmatprep.subr.bf16.mxu0 0
        %459 = vmatpush1.bf16.msra.mxu0 0
        %460 = vmatprep.subr.bf16.mxu0 0
        %461 = vmatpush1.bf16.msra.mxu0 0
        %462 = vmatprep.mubr.bf16.mxu0 0
        %463 = vmatmul.mubr.bf16.gmra.mrb[0].mxu0 %v428
        %v464 = vpop.f32.mrb[0].mxu0
        %v465 = vadd.f32 0.0, %v464
        %v466 = vpop.f32.mrb[0].mxu0
        %v467 = vpop.f32.mrb[0].mxu0
        %v468 = vadd.f32 0.0, %v467
        %v469 = vpop.f32.mrb[0].mxu0
        %470 = vdwg.mxu0
        %473 = vrot.lane.b32.xlu0 %v404, 96
        %v474 = vpop.permute.xlu0 %473
        %475 = vrot.lane.b32.xlu0 %v407, 96
        %v476 = vpop.permute.xlu0 %475
        %479 = vrot.lane.b32.xlu0 %v404, 32
        %v480 = vpop.permute.xlu0 %479
        %481 = vrot.lane.b32.xlu0 %v407, 32
        %v482 = vpop.permute.xlu0 %481
        %485 = vrot.lane.b32.xlu0 %v404, 64
        %v486 = vpop.permute.xlu0 %485
        %487 = vrot.lane.b32.xlu0 %v407, 64
        %v488 = vpop.permute.xlu0 %487
        %v491 = vsel %vm365, %v474, %v404
        %v492 = vsel %vm365, %v476, %v407
        %vm493 = vcmask 523264
        %v494 = vsel %vm493, %v491, %v480
        %v495 = vsel %vm493, %v492, %v482
        %vm496 = vcmask 785408
        %v497 = vsel %vm496, %v494, %v486
        %v498 = vsel %vm496, %v495, %v488
        %v499 = vmul.f32 %v465, %v497
        %v500 = vmul.f32 %v468, %v498
        %v501 = vpack.c.bf16 %v500, %v499
        %v502 = vld [vmem:[%s4] sm:$0xf]
        %v503 = vld [vmem:[%s4 + $0x4] sm:$0xf]
        %v504 = vld [vmem:[%s4 + $0x8] sm:$0xf]
        %v505 = vld [vmem:[%s4 + $0xc] sm:$0xf]
        %v506 = vld [vmem:[%s4 + $0x10] sm:$0xf]
        %v507 = vld [vmem:[%s4 + $0x14] sm:$0xf]
        %v508 = vld [vmem:[%s4 + $0x18] sm:$0xf]
        %v509 = vld [vmem:[%s4 + $0x1c] sm:$0xf]
        %v510 = vld [vmem:[%s4 + $0x20] sm:$0xf]
        %v511 = vld [vmem:[%s4 + $0x24] sm:$0xf]
        %v512 = vld [vmem:[%s4 + $0x28] sm:$0xf]
        %v513 = vld [vmem:[%s4 + $0x2c] sm:$0xf]
        %v514 = vld [vmem:[%s4 + $0x30] sm:$0xf]
        %v515 = vld [vmem:[%s4 + $0x34] sm:$0xf]
        %v516 = vld [vmem:[%s4 + $0x38] sm:$0xf]
        %v517 = vld [vmem:[%s4 + $0x3c] sm:$0xf]
        %v534 = vunpack.c.l.b16 %v502
        %v535 = vunpack.c.l.b16 %v503
        %v536 = vunpack.c.l.b16 %v504
        %v537 = vunpack.c.l.b16 %v505
        %v538 = vunpack.c.l.b16 %v506
        %v539 = vunpack.c.l.b16 %v507
        %v540 = vunpack.c.l.b16 %v508
        %v541 = vunpack.c.l.b16 %v509
        %v542 = vunpack.c.l.b16 %v510
        %v543 = vunpack.c.l.b16 %v511
        %v544 = vunpack.c.l.b16 %v512
        %v545 = vunpack.c.l.b16 %v513
        %v546 = vunpack.c.l.b16 %v514
        %v547 = vunpack.c.l.b16 %v515
        %v548 = vunpack.c.l.b16 %v516
        %v549 = vunpack.c.l.b16 %v517
        %v550 = vpack.c.b16 %v535, %v534
        %v551 = vpack.c.b16 %v537, %v536
        %v552 = vpack.c.b16 %v539, %v538
        %v553 = vpack.c.b16 %v541, %v540
        %v554 = vpack.c.b16 %v543, %v542
        %v555 = vpack.c.b16 %v545, %v544
        %v556 = vpack.c.b16 %v547, %v546
        %v557 = vpack.c.b16 %v549, %v548
        %566 = vmatprep.subr.bf16.mxu0 0
        %567 = vmatpush1.bf16.msra.mxu0 %v550
        %568 = vmatprep.subr.bf16.mxu0 0
        %569 = vmatpush1.bf16.msra.mxu0 %v551
        %570 = vmatprep.subr.bf16.mxu0 0
        %571 = vmatpush1.bf16.msra.mxu0 %v552
        %572 = vmatprep.subr.bf16.mxu0 0
        %573 = vmatpush1.bf16.msra.mxu0 %v553
        %574 = vmatprep.subr.bf16.mxu0 0
        %575 = vmatpush1.bf16.msra.mxu0 %v554
        %576 = vmatprep.subr.bf16.mxu0 0
        %577 = vmatpush1.bf16.msra.mxu0 %v555
        %578 = vmatprep.subr.bf16.mxu0 0
        %579 = vmatpush1.bf16.msra.mxu0 %v556
        %580 = vmatprep.subr.bf16.mxu0 0
        %581 = vmatpush1.bf16.msra.mxu0 %v557
        %582 = vmatprep.subr.bf16.mxu0 0
        %583 = vmatpush1.bf16.msra.mxu0 0
        %584 = vmatprep.subr.bf16.mxu0 0
        %585 = vmatpush1.bf16.msra.mxu0 0
        %586 = vmatprep.subr.bf16.mxu0 0
        %587 = vmatpush1.bf16.msra.mxu0 0
        %588 = vmatprep.subr.bf16.mxu0 0
        %589 = vmatpush1.bf16.msra.mxu0 0
        %590 = vmatprep.subr.bf16.mxu0 0
        %591 = vmatpush1.bf16.msra.mxu0 0
        %592 = vmatprep.subr.bf16.mxu0 0
        %593 = vmatpush1.bf16.msra.mxu0 0
        %594 = vmatprep.subr.bf16.mxu0 0
        %595 = vmatpush1.bf16.msra.mxu0 0
        %596 = vmatprep.subr.bf16.mxu0 0
        %597 = vmatpush1.bf16.msra.mxu0 0
        %598 = vmatprep.mubr.bf16.mxu0 0
        %599 = vmatmul.mubr.bf16.gmra.mrb[0].mxu0 %v501
        %v600 = vpop.f32.mrb[0].mxu0
        %v601 = vadd.f32 0.0, %v600
        %v602 = vpop.f32.mrb[0].mxu0
        %v603 = vpop.f32.mrb[0].mxu0
        %v604 = vadd.f32 0.0, %v603
        %v605 = vpop.f32.mrb[0].mxu0
        %606 = vdwg.mxu0
        %vm607 = vcmask 130048
        %v608 = vsel %vm607, %v601, -inf
        %v609 = vrot.slane %v608, 4
        %v610 = vmax.f32 %v608, %v609
        %v611 = vrot.slane %v610, 2
        %v612 = vmax.f32 %v610, %v611
        %v613 = vrot.slane %v612, 1
        %v614 = vmax.f32 %v612, %v613
        %v615 = vsel %vm607, %v604, -inf
        %v616 = vrot.slane %v615, 4
        %v617 = vmax.f32 %v615, %v616
        %v618 = vrot.slane %v617, 2
        %v619 = vmax.f32 %v617, %v618
        %v620 = vrot.slane %v619, 1
        %v621 = vmax.f32 %v619, %v620
        %v622 = vsub.f32 %v601, %v614
        %v623 = vsub.f32 %v604, %v621
        %v624 = vmul.f32 %v622, 1.442695
        %v625 = vpow.pop %v624
        %v626 = vmul.f32 %v623, 1.442695
        %v627 = vpow.pop %v626
        %v628 = vsel %vm607, %v625, 0.0
        %v629 = vrot.slane %v628, 4
        %v630 = vadd.f32 %v628, %v629
        %v631 = vrot.slane %v630, 2
        %v632 = vadd.f32 %v630, %v631
        %v633 = vrot.slane %v632, 1
        %v634 = vadd.f32 %v632, %v633
        %v635 = vsel %vm607, %v627, 0.0
        %v636 = vrot.slane %v635, 4
        %v637 = vadd.f32 %v635, %v636
        %v638 = vrot.slane %v637, 2
        %v639 = vadd.f32 %v637, %v638
        %v640 = vrot.slane %v639, 1
        %v641 = vadd.f32 %v639, %v640
        %v642 = vrcp.pop %v634
        %v643 = vrcp.pop %v641
        %v644 = vmul.f32 %v625, %v642
        %v645 = vmul.f32 %v627, %v643
        %v646 = vpack.c.bf16 %v645, %v644
        %v647 = vld [vmem:[%s5] sm:$0xf]
        %v648 = vld [vmem:[%s5 + $0x4] sm:$0xf]
        %v651 = vunpack.c.l.b16 %v647
        %v652 = vunpack.c.l.b16 %v648
        %v653 = vpack.c.b16 %v652, %v651
        %v656 = vsel %vm607, %v646, 0
        %658 = vmatprep.subr.bf16.mxu0 0
        %659 = vmatpush1.bf16.msra.mxu0 %v653
        %660 = vmatprep.subr.bf16.mxu0 0
        %661 = vmatpush1.bf16.msra.mxu0 0
        %662 = vmatprep.subr.bf16.mxu0 0
        %663 = vmatpush1.bf16.msra.mxu0 0
        %664 = vmatprep.subr.bf16.mxu0 0
        %665 = vmatpush1.bf16.msra.mxu0 0
        %666 = vmatprep.subr.bf16.mxu0 0
        %667 = vmatpush1.bf16.msra.mxu0 0
        %668 = vmatprep.subr.bf16.mxu0 0
        %669 = vmatpush1.bf16.msra.mxu0 0
        %670 = vmatprep.subr.bf16.mxu0 0
        %671 = vmatpush1.bf16.msra.mxu0 0
        %672 = vmatprep.subr.bf16.mxu0 0
        %673 = vmatpush1.bf16.msra.mxu0 0
        %674 = vmatprep.subr.bf16.mxu0 0
        %675 = vmatpush1.bf16.msra.mxu0 0
        %676 = vmatprep.subr.bf16.mxu0 0
        %677 = vmatpush1.bf16.msra.mxu0 0
        %678 = vmatprep.subr.bf16.mxu0 0
        %679 = vmatpush1.bf16.msra.mxu0 0
        %680 = vmatprep.subr.bf16.mxu0 0
        %681 = vmatpush1.bf16.msra.mxu0 0
        %682 = vmatprep.subr.bf16.mxu0 0
        %683 = vmatpush1.bf16.msra.mxu0 0
        %684 = vmatprep.subr.bf16.mxu0 0
        %685 = vmatpush1.bf16.msra.mxu0 0
        %686 = vmatprep.subr.bf16.mxu0 0
        %687 = vmatpush1.bf16.msra.mxu0 0
        %688 = vmatprep.subr.bf16.mxu0 0
        %689 = vmatpush1.bf16.msra.mxu0 0
        %690 = vmatprep.mubr.bf16.mxu0 0
        %691 = vmatmul.mubr.bf16.gmra.mrb[0].mxu0 %v656
        %v692 = vpop.f32.mrb[0].mxu0
        %v693 = vadd.f32 0.0, %v692
        %v694 = vpop.f32.mrb[0].mxu0
        %v695 = vpop.f32.mrb[0].mxu0
        %v696 = vadd.f32 0.0, %v695
        %v697 = vpop.f32.mrb[0].mxu0
        %698 = vdwg.mxu0
        %v699 = vsel %vm365, %v486, %v474
        %v700 = vsel %vm365, %v488, %v476
        %v701 = vsel %vm493, %v699, %v404
        %v702 = vsel %vm493, %v700, %v407
        %v703 = vsel %vm496, %v701, %v480
        %v704 = vsel %vm496, %v702, %v482
        %v705 = vmul.f32 %v693, %v703
        %v706 = vmul.f32 %v696, %v704
        %v707 = vpack.c.bf16 %v706, %v705
        %v708 = vld [vmem:[%s6] sm:$0xf]
        %v709 = vld [vmem:[%s6 + $0x4] sm:$0xf]
        %v710 = vld [vmem:[%s6 + $0x8] sm:$0xf]
        %v711 = vld [vmem:[%s6 + $0xc] sm:$0xf]
        %v712 = vld [vmem:[%s6 + $0x10] sm:$0xf]
        %v713 = vld [vmem:[%s6 + $0x14] sm:$0xf]
        %v714 = vld [vmem:[%s6 + $0x18] sm:$0xf]
        %v715 = vld [vmem:[%s6 + $0x1c] sm:$0xf]
        %v716 = vld [vmem:[%s6 + $0x20] sm:$0xf]
        %v717 = vld [vmem:[%s6 + $0x24] sm:$0xf]
        %v718 = vld [vmem:[%s6 + $0x28] sm:$0xf]
        %v719 = vld [vmem:[%s6 + $0x2c] sm:$0xf]
        %v720 = vld [vmem:[%s6 + $0x30] sm:$0xf]
        %v721 = vld [vmem:[%s6 + $0x34] sm:$0xf]
        %v722 = vld [vmem:[%s6 + $0x38] sm:$0xf]
        %v723 = vld [vmem:[%s6 + $0x3c] sm:$0xf]
        %v740 = vunpack.c.l.b16 %v708
        %v741 = vunpack.c.l.b16 %v709
        %v742 = vunpack.c.l.b16 %v710
        %v743 = vunpack.c.l.b16 %v711
        %v744 = vunpack.c.l.b16 %v712
        %v745 = vunpack.c.l.b16 %v713
        %v746 = vunpack.c.l.b16 %v714
        %v747 = vunpack.c.l.b16 %v715
        %v748 = vunpack.c.l.b16 %v716
        %v749 = vunpack.c.l.b16 %v717
        %v750 = vunpack.c.l.b16 %v718
        %v751 = vunpack.c.l.b16 %v719
        %v752 = vunpack.c.l.b16 %v720
        %v753 = vunpack.c.l.b16 %v721
        %v754 = vunpack.c.l.b16 %v722
        %v755 = vunpack.c.l.b16 %v723
        %v756 = vpack.c.b16 %v741, %v740
        %v757 = vpack.c.b16 %v743, %v742
        %v758 = vpack.c.b16 %v745, %v744
        %v759 = vpack.c.b16 %v747, %v746
        %v760 = vpack.c.b16 %v749, %v748
        %v761 = vpack.c.b16 %v751, %v750
        %v762 = vpack.c.b16 %v753, %v752
        %v763 = vpack.c.b16 %v755, %v754
        %772 = vmatprep.subr.bf16.mxu0 0
        %773 = vmatpush1.bf16.msra.mxu0 %v756
        %774 = vmatprep.subr.bf16.mxu0 0
        %775 = vmatpush1.bf16.msra.mxu0 %v757
        %776 = vmatprep.subr.bf16.mxu0 0
        %777 = vmatpush1.bf16.msra.mxu0 %v758
        %778 = vmatprep.subr.bf16.mxu0 0
        %779 = vmatpush1.bf16.msra.mxu0 %v759
        %780 = vmatprep.subr.bf16.mxu0 0
        %781 = vmatpush1.bf16.msra.mxu0 %v760
        %782 = vmatprep.subr.bf16.mxu0 0
        %783 = vmatpush1.bf16.msra.mxu0 %v761
        %784 = vmatprep.subr.bf16.mxu0 0
        %785 = vmatpush1.bf16.msra.mxu0 %v762
        %786 = vmatprep.subr.bf16.mxu0 0
        %787 = vmatpush1.bf16.msra.mxu0 %v763
        %788 = vmatprep.subr.bf16.mxu0 0
        %789 = vmatpush1.bf16.msra.mxu0 0
        %790 = vmatprep.subr.bf16.mxu0 0
        %791 = vmatpush1.bf16.msra.mxu0 0
        %792 = vmatprep.subr.bf16.mxu0 0
        %793 = vmatpush1.bf16.msra.mxu0 0
        %794 = vmatprep.subr.bf16.mxu0 0
        %795 = vmatpush1.bf16.msra.mxu0 0
        %796 = vmatprep.subr.bf16.mxu0 0
        %797 = vmatpush1.bf16.msra.mxu0 0
        %798 = vmatprep.subr.bf16.mxu0 0
        %799 = vmatpush1.bf16.msra.mxu0 0
        %800 = vmatprep.subr.bf16.mxu0 0
        %801 = vmatpush1.bf16.msra.mxu0 0
        %802 = vmatprep.subr.bf16.mxu0 0
        %803 = vmatpush1.bf16.msra.mxu0 0
        %804 = vmatprep.mubr.bf16.mxu0 0
        %805 = vmatmul.mubr.bf16.gmra.mrb[0].mxu0 %v707
        %v806 = vpop.f32.mrb[0].mxu0
        %v807 = vadd.f32 0.0, %v806
        %v808 = vpop.f32.mrb[0].mxu0
        %v809 = vpop.f32.mrb[0].mxu0
        %v810 = vadd.f32 0.0, %v809
        %v811 = vpop.f32.mrb[0].mxu0
        %812 = vdwg.mxu0
        %v813 = vpack.c.bf16 %v810, %v807
        %v814 = vld [vmem:[%s7] sm:$0xf]
        %v815 = vld [vmem:[%s7 + $0x4] sm:$0xf]
        %v816 = vld [vmem:[%s7 + $0x8] sm:$0xf]
        %v817 = vld [vmem:[%s7 + $0xc] sm:$0xf]
        %v818 = vld [vmem:[%s8] sm:$0x1]
        %v820 = vlaneseq
        %v821 = vshrl.u32 %v820, 7
        %v822 = vsub.s32 0, %v821
        %v823 = vrot.slane %v818, %v822
        %v829 = vunpack.c.l.b16 %v814
        %v830 = vunpack.c.l.b16 %v815
        %v831 = vunpack.c.l.b16 %v816
        %v832 = vunpack.c.l.b16 %v817
        %v833 = vpack.c.b16 %v830, %v829
        %v834 = vpack.c.b16 %v832, %v831
        %v838 = vsel %vm365, %v813, 0
        %840 = vmatprep.subr.bf16.mxu0 0
        %841 = vmatpush1.bf16.msra.mxu0 %v833
        %842 = vmatprep.subr.bf16.mxu0 0
        %843 = vmatpush1.bf16.msra.mxu0 %v834
        %844 = vmatprep.subr.bf16.mxu0 0
        %845 = vmatpush1.bf16.msra.mxu0 0
        %846 = vmatprep.subr.bf16.mxu0 0
        %847 = vmatpush1.bf16.msra.mxu0 0
        %848 = vmatprep.subr.bf16.mxu0 0
        %849 = vmatpush1.bf16.msra.mxu0 0
        %850 = vmatprep.subr.bf16.mxu0 0
        %851 = vmatpush1.bf16.msra.mxu0 0
        %852 = vmatprep.subr.bf16.mxu0 0
        %853 = vmatpush1.bf16.msra.mxu0 0
        %854 = vmatprep.subr.bf16.mxu0 0
        %855 = vmatpush1.bf16.msra.mxu0 0
        %856 = vmatprep.subr.bf16.mxu0 0
        %857 = vmatpush1.bf16.msra.mxu0 0
        %858 = vmatprep.subr.bf16.mxu0 0
        %859 = vmatpush1.bf16.msra.mxu0 0
        %860 = vmatprep.subr.bf16.mxu0 0
        %861 = vmatpush1.bf16.msra.mxu0 0
        %862 = vmatprep.subr.bf16.mxu0 0
        %863 = vmatpush1.bf16.msra.mxu0 0
        %864 = vmatprep.subr.bf16.mxu0 0
        %865 = vmatpush1.bf16.msra.mxu0 0
        %866 = vmatprep.subr.bf16.mxu0 0
        %867 = vmatpush1.bf16.msra.mxu0 0
        %868 = vmatprep.subr.bf16.mxu0 0
        %869 = vmatpush1.bf16.msra.mxu0 0
        %870 = vmatprep.subr.bf16.mxu0 0
        %871 = vmatpush1.bf16.msra.mxu0 0
        %872 = vmatprep.mubr.bf16.mxu0 0
        %873 = vmatmul.mubr.bf16.gmra.mrb[0].mxu0 %v838
        %v874 = vpop.f32.mrb[0].mxu0
        %v875 = vadd.f32 %v823, %v874
        %v876 = vpop.f32.mrb[0].mxu0
        %v877 = vpop.f32.mrb[0].mxu0
        %v878 = vadd.f32 %v823, %v877
        %v879 = vpop.f32.mrb[0].mxu0
        %880 = vdwg.mxu0
        %881 = vst.msk [vmem:[%s326] sm:$0xff] %vm365, %v875
        %882 = vst.msk [vmem:[%s326 + $0x8] sm:$0xff] %vm365, %v878
        %s883 = sand.u32 %s225, 1
        %s884 = scalar_lea.sflag [#allocation3], %s883
        %s885 = sand.u32 %s225, 1
        %s886 = smul.addr %s885, 16
        %s887 = scalar_lea.vmem [#allocation2], %s886
        // Predicated region
        $region57: #{_mha_impl.1} parent=55 // pred_check
          %p888 = pneg %p235
        $region58: #{_mha_impl.1} parent=55 // pred_check_branch
          %890 = sbr.rel (%p888) target = $region60
        $region59: #{_mha_impl.1} parent=55 // pred_region
          %s891 = smul.u32 2, %s23
          %s893 = ssub.s32 256, 256
          %894 = vsyncadd %s884, %s893
          %s895 = smul.addr %s891, 128
          %s896 = scalar_lea.hbm %s9, %s895
          %s897 = sshll.u32 %s887, 4
          %s898 = int_to_ptr.vmem [resolvable:$true] %s897
          %903 = dma.vmem_to_hbm [thread:$0]  %s898, 256, %s896, %s884, 128, 128, 8
        $region60: #{_mha_impl.1} parent=55 // pred_fallthru
          _
      $region56: #{_mha_impl.1} parent=5 // pred_fallthru
        _
      %p904 = scmp.le.s32.totalorder 2, %s18
      // Predicated region
      $region61: #{_mha_impl.1} parent=5 // pred_check
        %p905 = pneg %p904
      $region62: #{_mha_impl.1} parent=5 // pred_check_branch
        %907 = sbr.rel (%p905) target = $region64
      $region63: #{_mha_impl.1} parent=5 // pred_region
        %s908 = ssub.s32 %s18, 2
        // Predicated region
        $region65: #{_mha_impl.1} parent=63 // pred_check
          %p909 = pneg %p241
        $region66: #{_mha_impl.1} parent=63 // pred_check_branch
          %911 = sbr.rel (%p909) target = $region68
        $region67: #{_mha_impl.1} parent=63 // pred_region
          %s912 = sand.u32 %s226, 1
          %s913 = scalar_lea.sflag [#allocation3], %s912
          %s914 = sand.u32 %s226, 1
          %s915 = smul.addr %s914, 16
          %s916 = scalar_lea.vmem [#allocation2], %s915
          %917 = dma.done %s913, 256
        $region68: #{_mha_impl.1} parent=63 // pred_fallthru
          _
      $region64: #{_mha_impl.1} parent=5 // pred_fallthru
        _
    $region6: #{_mha_impl.1} parent=1 // loop_footer
      %s22 = sadd.s32 1, %s18
    $region7: #{_mha_impl.1} parent=1 // loop_footer_branch
      %17 = sbr.rel target = $region3
    $region8: #{_mha_impl.1} parent=1 // loop_exit
      _
    %918 = vsyncpa [#allocation3], 1
    %s919 = scalar_lea.sflag [#allocation3], 1
    %920 = vsyncpa %s919, 1

// kernel: _mha_impl.1
$region0: #{_mha_impl.1}
  #allocation0 [shape = 'u32[]', space=smem, size = 0x4, offset = 0x4, fixed_abs, tag = 'smem constant byte address 0x4 - core index']
  #allocation1 [shape = 'u32[144,128]{1,0:T(1,128)}', space=vmem, size = 0x12000, scoped, tag = 'internal scratch']
  %s0 = inlined_call_operand.vmem [shape: bf16[4,8,32], index: 0, kind: input, shape index: {}]
  %s1 = inlined_call_operand.vmem [shape: bf16[32,96], index: 1, kind: input, shape index: {}]
  %s2 = inlined_call_operand.vmem [shape: f32[1,96], index: 2, kind: input, shape index: {}]
  %s3 = inlined_call_operand.vmem [shape: bf16[32,128], index: 3, kind: input, shape index: {}]
  %s4 = inlined_call_operand.vmem [shape: bf16[128,16], index: 4, kind: input, shape index: {}]
  %s5 = inlined_call_operand.vmem [shape: bf16[16,128], index: 5, kind: input, shape index: {}]
  %s6 = inlined_call_operand.vmem [shape: bf16[128,32], index: 6, kind: input, shape index: {}]
  %s7 = inlined_call_operand.vmem [shape: bf16[32,32], index: 7, kind: input, shape index: {}]
  %s8 = inlined_call_operand.vmem [shape: f32[1,32], index: 8, kind: input, shape index: {}]
  %s9 = inlined_call_operand.hbm [shape: f32[4,8,32], index: 9, kind: output, shape index: {}]
  %s10 = sld [smem:[#allocation0]]
  $region69: #{_mha_impl.1} parent=0
    _
  %s12 = ssub.s32 1, %s10
  %s13 = scalar_select 0, %s12, %s10
  $region1: #{_mha_impl.1} parent=0
    #allocation2 [shape = 'u8[16384]{0}', space=vmem, size = 0x4000, scoped, tag = 'output window, operand 0']
    #allocation3 [shape = 's32[2]{0}', space=sflag, size = 0x8, scoped, tag = 'scoped memory for _mha_impl.1']
    %14 = vsyncpa [#allocation3], 0
    %s15 = scalar_lea.sflag [#allocation3], 1
    %16 = vsyncpa %s15, 0
    loop: start=0, step=1, limit=4
    $region2: #{_mha_impl.1} parent=1 // loop_pre_header
      _
    $region3: #{_mha_impl.1} parent=1 // loop_header
      %s18 = sphi 0, %s22
      %p19 = scmp.ge.s32.totalorder %s18, 4
      %s28 = sphi 0, %s30
      %s31 = sphi 0, %s28
      %s32 = sphi 0, %s31
      %s48 = sphi 0, %s32
      %s52 = sphi 0, %s52
      %s54 = sphi 0, %s52
      %s55 = sphi 0, %s54
      %s69 = sphi 0, %s55
      %s73 = sphi 0, %s73
      %s75 = sphi 0, %s73
      %s76 = sphi 0, %s75
      %s90 = sphi 0, %s76
      %s94 = sphi 0, %s94
      %s96 = sphi 0, %s94
      %s97 = sphi 0, %s96
      %s111 = sphi 0, %s97
      %s115 = sphi 0, %s115
      %s117 = sphi 0, %s115
      %s118 = sphi 0, %s117
      %s132 = sphi 0, %s118
      %s136 = sphi 0, %s136
      %s138 = sphi 0, %s136
      %s139 = sphi 0, %s138
      %s153 = sphi 0, %s139
      %s157 = sphi 0, %s157
      %s159 = sphi 0, %s157
      %s160 = sphi 0, %s159
      %s174 = sphi 0, %s160
      %s178 = sphi 0, %s178
      %s180 = sphi 0, %s178
      %s181 = sphi 0, %s180
      %s195 = sphi 0, %s181
      %s199 = sphi 0, %s199
      %s201 = sphi 0, %s199
      %s202 = sphi 0, %s201
      %s216 = sphi 0, %s202
      %s222 = sphi 0, %s224
      %s225 = sphi 0, %s222
      %s226 = sphi 0, %s225
      %s242 = sphi 0, %s226
    $region4: #{_mha_impl.1} parent=1 // loop_header_branch
      %21 = sbr.rel (%p19) target = $region8
    $region5: #{_mha_impl.1} parent=1 // loop_body
      %s23 = ssub.s32 %s18, 1
      %s24 = ssub.s32 %s18, 2
      %s25 = sadd.s32 %s18, 1
      %s26 = ssub.s32 %s18, %s25
      %p27 = scmp.eq.s32.totalorder %s26, 0
      %s29 = sadd.s32 %s28, 1
      %s30 = scalar_select %p27, %s28, %s29
      %p33 = pneg %p27
      %p34 = scmp.eq.s32.totalorder %s18, 1
      %p35 = por %p33, %p34
      %p36 = scmp.ne.s32.totalorder %s28, %s31
      %p37 = scmp.eq.s32.totalorder %s18, 0
      %p38 = por %p36, %p37
      %p39 = scmp.ne.s32.totalorder %s28, %s31
      %p40 = scmp.eq.s32.totalorder %s23, 1
      %p41 = por %p39, %p40
      %p42 = scmp.ne.s32.totalorder %s31, %s32
      %p43 = scmp.eq.s32.totalorder %s23, 0
      %p44 = por %p42, %p43
      %p45 = scmp.ne.s32.totalorder %s31, %s32
      %p46 = scmp.eq.s32.totalorder %s24, 1
      %p47 = por %p45, %p46
      %p49 = scmp.ne.s32.totalorder %s32, %s48
      %p50 = scmp.eq.s32.totalorder %s24, 0
      %p51 = por %p49, %p50
      %s53 = sadd.s32 %s52, 1
      %p56 = scmp.eq.s32.totalorder %s18, 1
      %p57 = scmp.ne.s32.totalorder %s52, %s54
      %p58 = scmp.eq.s32.totalorder %s18, 0
      %p59 = por %p57, %p58
      %p60 = scmp.ne.s32.totalorder %s52, %s54
      %p61 = scmp.eq.s32.totalorder %s23, 1
      %p62 = por %p60, %p61
      %p63 = scmp.ne.s32.totalorder %s54, %s55
      %p64 = scmp.eq.s32.totalorder %s23, 0
      %p65 = por %p63, %p64
      %p66 = scmp.ne.s32.totalorder %s54, %s55
      %p67 = scmp.eq.s32.totalorder %s24, 1
      %p68 = por %p66, %p67
      %p70 = scmp.ne.s32.totalorder %s55, %s69
      %p71 = scmp.eq.s32.totalorder %s24, 0
      %p72 = por %p70, %p71
      %s74 = sadd.s32 %s73, 1
      %p77 = scmp.eq.s32.totalorder %s18, 1
      %p78 = scmp.ne.s32.totalorder %s73, %s75
      %p79 = scmp.eq.s32.totalorder %s18, 0
      %p80 = por %p78, %p79
      %p81 = scmp.ne.s32.totalorder %s73, %s75
      %p82 = scmp.eq.s32.totalorder %s23, 1
      %p83 = por %p81, %p82
      %p84 = scmp.ne.s32.totalorder %s75, %s76
      %p85 = scmp.eq.s32.totalorder %s23, 0
      %p86 = por %p84, %p85
      %p87 = scmp.ne.s32.totalorder %s75, %s76
      %p88 = scmp.eq.s32.totalorder %s24, 1
      %p89 = por %p87, %p88
      %p91 = scmp.ne.s32.totalorder %s76, %s90
      %p92 = scmp.eq.s32.totalorder %s24, 0
      %p93 = por %p91, %p92
      %s95 = sadd.s32 %s94, 1
      %p98 = scmp.eq.s32.totalorder %s18, 1
      %p99 = scmp.ne.s32.totalorder %s94, %s96
      %p100 = scmp.eq.s32.totalorder %s18, 0
      %p101 = por %p99, %p100
      %p102 = scmp.ne.s32.totalorder %s94, %s96
      %p103 = scmp.eq.s32.totalorder %s23, 1
      %p104 = por %p102, %p103
      %p105 = scmp.ne.s32.totalorder %s96, %s97
      %p106 = scmp.eq.s32.totalorder %s23, 0
      %p107 = por %p105, %p106
      %p108 = scmp.ne.s32.totalorder %s96, %s97
      %p109 = scmp.eq.s32.totalorder %s24, 1
      %p110 = por %p108, %p109
      %p112 = scmp.ne.s32.totalorder %s97, %s111
      %p113 = scmp.eq.s32.totalorder %s24, 0
      %p114 = por %p112, %p113
      %s116 = sadd.s32 %s115, 1
      %p119 = scmp.eq.s32.totalorder %s18, 1
      %p120 = scmp.ne.s32.totalorder %s115, %s117
      %p121 = scmp.eq.s32.totalorder %s18, 0
      %p122 = por %p120, %p121
      %p123 = scmp.ne.s32.totalorder %s115, %s117
      %p124 = scmp.eq.s32.totalorder %s23, 1
      %p125 = por %p123, %p124
      %p126 = scmp.ne.s32.totalorder %s117, %s118
      %p127 = scmp.eq.s32.totalorder %s23, 0
      %p128 = por %p126, %p127
      %p129 = scmp.ne.s32.totalorder %s117, %s118
      %p130 = scmp.eq.s32.totalorder %s24, 1
      %p131 = por %p129, %p130
      %p133 = scmp.ne.s32.totalorder %s118, %s132
      %p134 = scmp.eq.s32.totalorder %s24, 0
      %p135 = por %p133, %p134
      %s137 = sadd.s32 %s136, 1
      %p140 = scmp.eq.s32.totalorder %s18, 1
      %p141 = scmp.ne.s32.totalorder %s136, %s138
      %p142 = scmp.eq.s32.totalorder %s18, 0
      %p143 = por %p141, %p142
      %p144 = scmp.ne.s32.totalorder %s136, %s138
      %p145 = scmp.eq.s32.totalorder %s23, 1
      %p146 = por %p144, %p145
      %p147 = scmp.ne.s32.totalorder %s138, %s139
      %p148 = scmp.eq.s32.totalorder %s23, 0
      %p149 = por %p147, %p148
      %p150 = scmp.ne.s32.totalorder %s138, %s139
      %p151 = scmp.eq.s32.totalorder %s24, 1
      %p152 = por %p150, %p151
      %p154 = scmp.ne.s32.totalorder %s139, %s153
      %p155 = scmp.eq.s32.totalorder %s24, 0
      %p156 = por %p154, %p155
      %s158 = sadd.s32 %s157, 1
      %p161 = scmp.eq.s32.totalorder %s18, 1
      %p162 = scmp.ne.s32.totalorder %s157, %s159
      %p163 = scmp.eq.s32.totalorder %s18, 0
      %p164 = por %p162, %p163
      %p165 = scmp.ne.s32.totalorder %s157, %s159
      %p166 = scmp.eq.s32.totalorder %s23, 1
      %p167 = por %p165, %p166
      %p168 = scmp.ne.s32.totalorder %s159, %s160
      %p169 = scmp.eq.s32.totalorder %s23, 0
      %p170 = por %p168, %p169
      %p171 = scmp.ne.s32.totalorder %s159, %s160
      %p172 = scmp.eq.s32.totalorder %s24, 1
      %p173 = por %p171, %p172
      %p175 = scmp.ne.s32.totalorder %s160, %s174
      %p176 = scmp.eq.s32.totalorder %s24, 0
      %p177 = por %p175, %p176
      %s179 = sadd.s32 %s178, 1
      %p182 = scmp.eq.s32.totalorder %s18, 1
      %p183 = scmp.ne.s32.totalorder %s178, %s180
      %p184 = scmp.eq.s32.totalorder %s18, 0
      %p185 = por %p183, %p184
      %p186 = scmp.ne.s32.totalorder %s178, %s180
      %p187 = scmp.eq.s32.totalorder %s23, 1
      %p188 = por %p186, %p187
      %p189 = scmp.ne.s32.totalorder %s180, %s181
      %p190 = scmp.eq.s32.totalorder %s23, 0
      %p191 = por %p189, %p190
      %p192 = scmp.ne.s32.totalorder %s180, %s181
      %p193 = scmp.eq.s32.totalorder %s24, 1
      %p194 = por %p192, %p193
      %p196 = scmp.ne.s32.totalorder %s181, %s195
      %p197 = scmp.eq.s32.totalorder %s24, 0
      %p198 = por %p196, %p197
      %s200 = sadd.s32 %s199, 1
      %p203 = scmp.eq.s32.totalorder %s18, 1
      %p204 = scmp.ne.s32.totalorder %s199, %s201
      %p205 = scmp.eq.s32.totalorder %s18, 0
      %p206 = por %p204, %p205
      %p207 = scmp.ne.s32.totalorder %s199, %s201
      %p208 = scmp.eq.s32.totalorder %s23, 1
      %p209 = por %p207, %p208
      %p210 = scmp.ne.s32.totalorder %s201, %s202
      %p211 = scmp.eq.s32.totalorder %s23, 0
      %p212 = por %p210, %p211
      %p213 = scmp.ne.s32.totalorder %s201, %s202
      %p214 = scmp.eq.s32.totalorder %s24, 1
      %p215 = por %p213, %p214
      %p217 = scmp.ne.s32.totalorder %s202, %s216
      %p218 = scmp.eq.s32.totalorder %s24, 0
      %p219 = por %p217, %p218
      %s220 = ssub.s32 %s18, %s25
      %p221 = scmp.eq.s32.totalorder %s220, 0
      %s223 = sadd.s32 %s222, 1
      %s224 = scalar_select %p221, %s222, %s223
      %p227 = pneg %p221
      %p228 = scmp.eq.s32.totalorder %s18, 1
      %p229 = por %p227, %p228
      %p230 = scmp.ne.s32.totalorder %s222, %s225
      %p231 = scmp.eq.s32.totalorder %s18, 0
      %p232 = por %p230, %p231
      %p233 = scmp.ne.s32.totalorder %s222, %s225
      %p234 = scmp.eq.s32.totalorder %s23, 1
      %p235 = por %p233, %p234
      %p236 = scmp.ne.s32.totalorder %s225, %s226
      %p237 = scmp.eq.s32.totalorder %s23, 0
      %p238 = por %p236, %p237
      %p239 = scmp.ne.s32.totalorder %s225, %s226
      %p240 = scmp.eq.s32.totalorder %s24, 1
      %p241 = por %p239, %p240
      %p243 = scmp.ne.s32.totalorder %s226, %s242
      %p244 = scmp.eq.s32.totalorder %s24, 0
      %p245 = por %p243, %p244
      %p246 = scmp.le.s32.totalorder 1, %s18
      %p247 = scmp.lt.s32.totalorder %s18, 3
      %p248 = pnand %p246, %p247
      %p249 = pneg %p248
      // Predicated region
      $region9: #{_mha_impl.1} parent=5 // pred_check
        _
      $region10: #{_mha_impl.1} parent=5 // pred_check_branch
        %251 = sbr.rel (%p248) target = $region12
      $region11: #{_mha_impl.1} parent=5 // pred_region
        %s252 = ssub.s32 %s18, 1
        // Predicated region
        $region13: #{_mha_impl.1} parent=11 // pred_check
          %p253 = pneg %p65
        $region14: #{_mha_impl.1} parent=11 // pred_check_branch
          %255 = sbr.rel (%p253) target = $region16
        $region15: #{_mha_impl.1} parent=11 // pred_region
          _
        $region16: #{_mha_impl.1} parent=11 // pred_fallthru
          _
        // Predicated region
        $region17: #{_mha_impl.1} parent=11 // pred_check
          %p256 = pneg %p86
        $region18: #{_mha_impl.1} parent=11 // pred_check_branch
          %258 = sbr.rel (%p256) target = $region20
        $region19: #{_mha_impl.1} parent=11 // pred_region
          _
        $region20: #{_mha_impl.1} parent=11 // pred_fallthru
          _
        // Predicated region
        $region21: #{_mha_impl.1} parent=11 // pred_check
          %p259 = pneg %p107
        $region22: #{_mha_impl.1} parent=11 // pred_check_branch
          %261 = sbr.rel (%p259) target = $region24
        $region23: #{_mha_impl.1} parent=11 // pred_region
          _
        $region24: #{_mha_impl.1} parent=11 // pred_fallthru
          _
        // Predicated region
        $region25: #{_mha_impl.1} parent=11 // pred_check
          %p262 = pneg %p128
        $region26: #{_mha_impl.1} parent=11 // pred_check_branch
          %264 = sbr.rel (%p262) target = $region28
        $region27: #{_mha_impl.1} parent=11 // pred_region
          _
        $region28: #{_mha_impl.1} parent=11 // pred_fallthru
          _
        // Predicated region
        $region29: #{_mha_impl.1} parent=11 // pred_check
          %p265 = pneg %p149
        $region30: #{_mha_impl.1} parent=11 // pred_check_branch
          %267 = sbr.rel (%p265) target = $region32
        $region31: #{_mha_impl.1} parent=11 // pred_region
          _
        $region32: #{_mha_impl.1} parent=11 // pred_fallthru
          _
        // Predicated region
        $region33: #{_mha_impl.1} parent=11 // pred_check
          %p268 = pneg %p170
        $region34: #{_mha_impl.1} parent=11 // pred_check_branch
          %270 = sbr.rel (%p268) target = $region36
        $region35: #{_mha_impl.1} parent=11 // pred_region
          _
        $region36: #{_mha_impl.1} parent=11 // pred_fallthru
          _
        // Predicated region
        $region37: #{_mha_impl.1} parent=11 // pred_check
          %p271 = pneg %p191
        $region38: #{_mha_impl.1} parent=11 // pred_check_branch
          %273 = sbr.rel (%p271) target = $region40
        $region39: #{_mha_impl.1} parent=11 // pred_region
          _
        $region40: #{_mha_impl.1} parent=11 // pred_fallthru
          _
        // Predicated region
        $region41: #{_mha_impl.1} parent=11 // pred_check
          %p274 = pneg %p212
        $region42: #{_mha_impl.1} parent=11 // pred_check_branch
          %276 = sbr.rel (%p274) target = $region44
        $region43: #{_mha_impl.1} parent=11 // pred_region
          _
        $region44: #{_mha_impl.1} parent=11 // pred_fallthru
          _
      $region12: #{_mha_impl.1} parent=5 // pred_fallthru
        _
      %p277 = scmp.lt.s32.totalorder %s18, 2
      // Predicated region
      $region45: #{_mha_impl.1} parent=5 // pred_check
        %p278 = pneg %p277
      $region46: #{_mha_impl.1} parent=5 // pred_check_branch
        %280 = sbr.rel (%p278) target = $region48
      $region47: #{_mha_impl.1} parent=5 // pred_region
        // Predicated region
        $region49: #{_mha_impl.1} parent=47 // pred_check
          %p281 = pneg %p38
        $region50: #{_mha_impl.1} parent=47 // pred_check_branch
          %283 = sbr.rel (%p281) target = $region52
        $region51: #{_mha_impl.1} parent=47 // pred_region
          %s284 = smul.u32 2, %s18
          %p285 = scmp.lt.s32.totalorder %s284, 3
          %s286 = scalar_select %p285, %s284, 3
          %s287 = smul.addr %s286, 4
          %s288 = scalar_lea.vmem %s0, %s287
          %s289 = smul.u32 2, %s18
        $region52: #{_mha_impl.1} parent=47 // pred_fallthru
          _
      $region48: #{_mha_impl.1} parent=5 // pred_fallthru
        _
      %p290 = scmp.le.s32.totalorder 1, %s18
      %p291 = scmp.lt.s32.totalorder %s18, 3
      %p292 = pnand %p290, %p291
      %p293 = pneg %p292
      // Predicated region
      $region53: #{_mha_impl.1} parent=5 // pred_check
        _
      $region54: #{_mha_impl.1} parent=5 // pred_check_branch
        %295 = sbr.rel (%p292) target = $region56
      $region55: #{_mha_impl.1} parent=5 // pred_region
        %s296 = ssub.s32 %s18, 1
        %s297 = smul.u32 2, %s23
        %p298 = scmp.lt.s32.totalorder %s297, 3
        %s299 = scalar_select %p298, %s297, 3
        %s300 = smul.addr %s299, 4
        %s301 = scalar_lea.vmem %s0, %s300
        %p302 = pneg %p44
        %p303 = pneg %p41
        %p304 = pneg %p65
        %p305 = pneg %p62
        %p306 = pneg %p86
        %p307 = pneg %p83
        %p308 = pneg %p107
        %p309 = pneg %p104
        %p310 = pneg %p128
        %p311 = pneg %p125
        %p312 = pneg %p149
        %p313 = pneg %p146
        %p314 = pneg %p170
        %p315 = pneg %p167
        %p316 = pneg %p191
        %p317 = pneg %p188
        %p318 = pneg %p212
        %p319 = pneg %p209
        %p320 = pneg %p238
        %p321 = pneg %p235
        %s322 = sand.u32 %s225, 1
        %s323 = scalar_lea.sflag [#allocation3], %s322
        %s324 = sand.u32 %s225, 1
        %s325 = smul.addr %s324, 16
        %s326 = scalar_lea.vmem [#allocation2], %s325
        %s327 = smul.u32 2, %s23
        %p328 = scmp.lt.s32.totalorder %s327, 3
        %s329 = scalar_select %p328, %s327, 3
        %s330 = smul.addr %s329, 4
        %s331 = scalar_lea.vmem %s0, %s330
        %s332 = smul.u32 2, %s23
        %s333 = smul.u32 2, %s23
        %v335 = vld [vmem:[%s331] sm:$0xf]
        %v336 = vld [vmem:[%s331 + $0x4] sm:$0xf]
        %v337 = vld [vmem:[%s1] sm:$0xf]
        %v338 = vld [vmem:[%s1 + $0x4] sm:$0xf]
        %v339 = vld [vmem:[%s1 + $0x8] sm:$0xf]
        %v340 = vld [vmem:[%s1 + $0xc] sm:$0xf]
        %v341 = vld [vmem:[%s2] sm:$0x1]
        %v343 = vlaneseq
        %v344 = vshrl.u32 %v343, 7
        %v345 = vsub.s32 0, %v344
        %v346 = vrot.slane %v341, %v345
        %v350 = vunpack.c.l.b16 %v335
        %v351 = vunpack.c.l.b16 %v336
        %v352 = vpack.c.b16 %v351, %v350
        %v357 = vunpack.c.l.b16 %v337
        %v358 = vunpack.c.l.b16 %v338
        %v359 = vunpack.c.l.b16 %v339
        %v360 = vunpack.c.l.b16 %v340
        %v361 = vpack.c.b16 %v358, %v357
        %v362 = vpack.c.b16 %v360, %v359
        %vm365 = vcmask 261120
        %v367 = vsel %vm365, %v352, 0
        %369 = vmatprep.subr.bf16.mxu0 0
        %370 = vmatpush1.bf16.msra.mxu0 %v361
        %371 = vmatprep.subr.bf16.mxu0 0
        %372 = vmatpush1.bf16.msra.mxu0 %v362
        %373 = vmatprep.subr.bf16.mxu0 0
        %374 = vmatpush1.bf16.msra.mxu0 0
        %375 = vmatprep.subr.bf16.mxu0 0
        %376 = vmatpush1.bf16.msra.mxu0 0
        %377 = vmatprep.subr.bf16.mxu0 0
        %378 = vmatpush1.bf16.msra.mxu0 0
        %379 = vmatprep.subr.bf16.mxu0 0
        %380 = vmatpush1.bf16.msra.mxu0 0
        %381 = vmatprep.subr.bf16.mxu0 0
        %382 = vmatpush1.bf16.msra.mxu0 0
        %383 = vmatprep.subr.bf16.mxu0 0
        %384 = vmatpush1.bf16.msra.mxu0 0
        %385 = vmatprep.subr.bf16.mxu0 0
        %386 = vmatpush1.bf16.msra.mxu0 0
        %387 = vmatprep.subr.bf16.mxu0 0
        %388 = vmatpush1.bf16.msra.mxu0 0
        %389 = vmatprep.subr.bf16.mxu0 0
        %390 = vmatpush1.bf16.msra.mxu0 0
        %391 = vmatprep.subr.bf16.mxu0 0
        %392 = vmatpush1.bf16.msra.mxu0 0
        %393 = vmatprep.subr.bf16.mxu0 0
        %394 = vmatpush1.bf16.msra.mxu0 0
        %395 = vmatprep.subr.bf16.mxu0 0
        %396 = vmatpush1.bf16.msra.mxu0 0
        %397 = vmatprep.subr.bf16.mxu0 0
        %398 = vmatpush1.bf16.msra.mxu0 0
        %399 = vmatprep.subr.bf16.mxu0 0
        %400 = vmatpush1.bf16.msra.mxu0 0
        %401 = vmatprep.mubr.bf16.mxu0 0
        %402 = vmatmul.mubr.bf16.gmra.mrb[0].mxu0 %v367
        %v403 = vpop.f32.mrb[0].mxu0
        %v404 = vadd.f32 %v346, %v403
        %v405 = vpop.f32.mrb[0].mxu0
        %v406 = vpop.f32.mrb[0].mxu0
        %v407 = vadd.f32 %v346, %v406
        %v408 = vpop.f32.mrb[0].mxu0
        %409 = vdwg.mxu0
        %v410 = vpack.c.bf16 %v407, %v404
        %v411 = vld [vmem:[%s3] sm:$0xf]
        %v412 = vld [vmem:[%s3 + $0x4] sm:$0xf]
        %v413 = vld [vmem:[%s3 + $0x8] sm:$0xf]
        %v414 = vld [vmem:[%s3 + $0xc] sm:$0xf]
        %v419 = vunpack.c.l.b16 %v411
        %v420 = vunpack.c.l.b16 %v412
        %v421 = vunpack.c.l.b16 %v413
        %v422 = vunpack.c.l.b16 %v414
        %v423 = vpack.c.b16 %v420, %v419
        %v424 = vpack.c.b16 %v422, %v421
        %v428 = vsel %vm365, %v410, 0
        %430 = vmatprep.subr.bf16.mxu0 0
        %431 = vmatpush1.bf16.msra.mxu0 %v423
        %432 = vmatprep.subr.bf16.mxu0 0
        %433 = vmatpush1.bf16.msra.mxu0 %v424
        %434 = vmatprep.subr.bf16.mxu0 0
        %435 = vmatpush1.bf16.msra.mxu0 0
        %436 = vmatprep.subr.bf16.mxu0 0
        %437 = vmatpush1.bf16.msra.mxu0 0
        %438 = vmatprep.subr.bf16.mxu0 0
        %439 = vmatpush1.bf16.msra.mxu0 0
        %440 = vmatprep.subr.bf16.mxu0 0
        %441 = vmatpush1.bf16.msra.mxu0 0
        %442 = vmatprep.subr.bf16.mxu0 0
        %443 = vmatpush1.bf16.msra.mxu0 0
        %444 = vmatprep.subr.bf16.mxu0 0
        %445 = vmatpush1.bf16.msra.mxu0 0
        %446 = vmatprep.subr.bf16.mxu0 0
        %447 = vmatpush1.bf16.msra.mxu0 0
        %448 = vmatprep.subr.bf16.mxu0 0
        %449 = vmatpush1.bf16.msra.mxu0 0
        %450 = vmatprep.subr.bf16.mxu0 0
        %451 = vmatpush1.bf16.msra.mxu0 0
        %452 = vmatprep.subr.bf16.mxu0 0
        %453 = vmatpush1.bf16.msra.mxu0 0
        %454 = vmatprep.subr.bf16.mxu0 0
        %455 = vmatpush1.bf16.msra.mxu0 0
        %456 = vmatprep.subr.bf16.mxu0 0
        %457 = vmatpush1.bf16.msra.mxu0 0
        %458 = vmatprep.subr.bf16.mxu0 0
        %459 = vmatpush1.bf16.msra.mxu0 0
        %460 = vmatprep.subr.bf16.mxu0 0
        %461 = vmatpush1.bf16.msra.mxu0 0
        %462 = vmatprep.mubr.bf16.mxu0 0
        %463 = vmatmul.mubr.bf16.gmra.mrb[0].mxu0 %v428
        %v464 = vpop.f32.mrb[0].mxu0
        %v465 = vadd.f32 0.0, %v464
        %v466 = vpop.f32.mrb[0].mxu0
        %v467 = vpop.f32.mrb[0].mxu0
        %v468 = vadd.f32 0.0, %v467
        %v469 = vpop.f32.mrb[0].mxu0
        %470 = vdwg.mxu0
        %473 = vrot.lane.b32.xlu0 %v404, 96
        %v474 = vpop.permute.xlu0 %473
        %475 = vrot.lane.b32.xlu0 %v407, 96
        %v476 = vpop.permute.xlu0 %475
        %479 = vrot.lane.b32.xlu0 %v404, 32
        %v480 = vpop.permute.xlu0 %479
        %481 = vrot.lane.b32.xlu0 %v407, 32
        %v482 = vpop.permute.xlu0 %481
        %485 = vrot.lane.b32.xlu0 %v404, 64
        %v486 = vpop.permute.xlu0 %485
        %487 = vrot.lane.b32.xlu0 %v407, 64
        %v488 = vpop.permute.xlu0 %487
        %v491 = vsel %vm365, %v474, %v404
        %v492 = vsel %vm365, %v476, %v407
        %vm493 = vcmask 523264
        %v494 = vsel %vm493, %v491, %v480
        %v495 = vsel %vm493, %v492, %v482
        %vm496 = vcmask 785408
        %v497 = vsel %vm496, %v494, %v486
        %v498 = vsel %vm496, %v495, %v488
        %v499 = vmul.f32 %v465, %v497
        %v500 = vmul.f32 %v468, %v498
        %v501 = vpack.c.bf16 %v500, %v499
        %v502 = vld [vmem:[%s4] sm:$0xf]
        %v503 = vld [vmem:[%s4 + $0x4] sm:$0xf]
        %v504 = vld [vmem:[%s4 + $0x8] sm:$0xf]
        %v505 = vld [vmem:[%s4 + $0xc] sm:$0xf]
        %v506 = vld [vmem:[%s4 + $0x10] sm:$0xf]
        %v507 = vld [vmem:[%s4 + $0x14] sm:$0xf]
        %v508 = vld [vmem:[%s4 + $0x18] sm:$0xf]
        %v509 = vld [vmem:[%s4 + $0x1c] sm:$0xf]
        %v510 = vld [vmem:[%s4 + $0x20] sm:$0xf]
        %v511 = vld [vmem:[%s4 + $0x24] sm:$0xf]
        %v512 = vld [vmem:[%s4 + $0x28] sm:$0xf]
        %v513 = vld [vmem:[%s4 + $0x2c] sm:$0xf]
        %v514 = vld [vmem:[%s4 + $0x30] sm:$0xf]
        %v515 = vld [vmem:[%s4 + $0x34] sm:$0xf]
        %v516 = vld [vmem:[%s4 + $0x38] sm:$0xf]
        %v517 = vld [vmem:[%s4 + $0x3c] sm:$0xf]
        %v534 = vunpack.c.l.b16 %v502
        %v535 = vunpack.c.l.b16 %v503
        %v536 = vunpack.c.l.b16 %v504
        %v537 = vunpack.c.l.b16 %v505
        %v538 = vunpack.c.l.b16 %v506
        %v539 = vunpack.c.l.b16 %v507
        %v540 = vunpack.c.l.b16 %v508
        %v541 = vunpack.c.l.b16 %v509
        %v542 = vunpack.c.l.b16 %v510
        %v543 = vunpack.c.l.b16 %v511
        %v544 = vunpack.c.l.b16 %v512
        %v545 = vunpack.c.l.b16 %v513
        %v546 = vunpack.c.l.b16 %v514
        %v547 = vunpack.c.l.b16 %v515
        %v548 = vunpack.c.l.b16 %v516
        %v549 = vunpack.c.l.b16 %v517
        %v550 = vpack.c.b16 %v535, %v534
        %v551 = vpack.c.b16 %v537, %v536
        %v552 = vpack.c.b16 %v539, %v538
        %v553 = vpack.c.b16 %v541, %v540
        %v554 = vpack.c.b16 %v543, %v542
        %v555 = vpack.c.b16 %v545, %v544
        %v556 = vpack.c.b16 %v547, %v546
        %v557 = vpack.c.b16 %v549, %v548
        %566 = vmatprep.subr.bf16.mxu0 0
        %567 = vmatpush1.bf16.msra.mxu0 %v550
        %568 = vmatprep.subr.bf16.mxu0 0
        %569 = vmatpush1.bf16.msra.mxu0 %v551
        %570 = vmatprep.subr.bf16.mxu0 0
        %571 = vmatpush1.bf16.msra.mxu0 %v552
        %572 = vmatprep.subr.bf16.mxu0 0
        %573 = vmatpush1.bf16.msra.mxu0 %v553
        %574 = vmatprep.subr.bf16.mxu0 0
        %575 = vmatpush1.bf16.msra.mxu0 %v554
        %576 = vmatprep.subr.bf16.mxu0 0
        %577 = vmatpush1.bf16.msra.mxu0 %v555
        %578 = vmatprep.subr.bf16.mxu0 0
        %579 = vmatpush1.bf16.msra.mxu0 %v556
        %580 = vmatprep.subr.bf16.mxu0 0
        %581 = vmatpush1.bf16.msra.mxu0 %v557
        %582 = vmatprep.subr.bf16.mxu0 0
        %583 = vmatpush1.bf16.msra.mxu0 0
        %584 = vmatprep.subr.bf16.mxu0 0
        %585 = vmatpush1.bf16.msra.mxu0 0
        %586 = vmatprep.subr.bf16.mxu0 0
        %587 = vmatpush1.bf16.msra.mxu0 0
        %588 = vmatprep.subr.bf16.mxu0 0
        %589 = vmatpush1.bf16.msra.mxu0 0
        %590 = vmatprep.subr.bf16.mxu0 0
        %591 = vmatpush1.bf16.msra.mxu0 0
        %592 = vmatprep.subr.bf16.mxu0 0
        %593 = vmatpush1.bf16.msra.mxu0 0
        %594 = vmatprep.subr.bf16.mxu0 0
        %595 = vmatpush1.bf16.msra.mxu0 0
        %596 = vmatprep.subr.bf16.mxu0 0
        %597 = vmatpush1.bf16.msra.mxu0 0
        %598 = vmatprep.mubr.bf16.mxu0 0
        %599 = vmatmul.mubr.bf16.gmra.mrb[0].mxu0 %v501
        %v600 = vpop.f32.mrb[0].mxu0
        %v601 = vadd.f32 0.0, %v600
        %v602 = vpop.f32.mrb[0].mxu0
        %v603 = vpop.f32.mrb[0].mxu0
        %v604 = vadd.f32 0.0, %v603
        %v605 = vpop.f32.mrb[0].mxu0
        %606 = vdwg.mxu0
        %vm607 = vcmask 130048
        %v608 = vsel %vm607, %v601, -inf
        %v609 = vrot.slane %v608, 4
        %v610 = vmax.f32 %v608, %v609
        %v611 = vrot.slane %v610, 2
        %v612 = vmax.f32 %v610, %v611
        %v613 = vrot.slane %v612, 1
        %v614 = vmax.f32 %v612, %v613
        %v615 = vsel %vm607, %v604, -inf
        %v616 = vrot.slane %v615, 4
        %v617 = vmax.f32 %v615, %v616
        %v618 = vrot.slane %v617, 2
        %v619 = vmax.f32 %v617, %v618
        %v620 = vrot.slane %v619, 1
        %v621 = vmax.f32 %v619, %v620
        %v622 = vsub.f32 %v601, %v614
        %v623 = vsub.f32 %v604, %v621
        %v624 = vmul.f32 %v622, 1.442695
        %v625 = vpow.pop %v624
        %v626 = vmul.f32 %v623, 1.442695
        %v627 = vpow.pop %v626
        %v628 = vsel %vm607, %v625, 0.0
        %v629 = vrot.slane %v628, 4
        %v630 = vadd.f32 %v628, %v629
        %v631 = vrot.slane %v630, 2
        %v632 = vadd.f32 %v630, %v631
        %v633 = vrot.slane %v632, 1
        %v634 = vadd.f32 %v632, %v633
        %v635 = vsel %vm607, %v627, 0.0
        %v636 = vrot.slane %v635, 4
        %v637 = vadd.f32 %v635, %v636
        %v638 = vrot.slane %v637, 2
        %v639 = vadd.f32 %v637, %v638
        %v640 = vrot.slane %v639, 1
        %v641 = vadd.f32 %v639, %v640
        %v642 = vrcp.pop %v634
        %v643 = vrcp.pop %v641
        %v644 = vmul.f32 %v625, %v642
        %v645 = vmul.f32 %v627, %v643
        %v646 = vpack.c.bf16 %v645, %v644
        %v647 = vld [vmem:[%s5] sm:$0xf]
        %v648 = vld [vmem:[%s5 + $0x4] sm:$0xf]
        %v651 = vunpack.c.l.b16 %v647
        %v652 = vunpack.c.l.b16 %v648
        %v653 = vpack.c.b16 %v652, %v651
        %v656 = vsel %vm607, %v646, 0
        %658 = vmatprep.subr.bf16.mxu0 0
        %659 = vmatpush1.bf16.msra.mxu0 %v653
        %660 = vmatprep.subr.bf16.mxu0 0
        %661 = vmatpush1.bf16.msra.mxu0 0
        %662 = vmatprep.subr.bf16.mxu0 0
        %663 = vmatpush1.bf16.msra.mxu0 0
        %664 = vmatprep.subr.bf16.mxu0 0
        %665 = vmatpush1.bf16.msra.mxu0 0
        %666 = vmatprep.subr.bf16.mxu0 0
        %667 = vmatpush1.bf16.msra.mxu0 0
        %668 = vmatprep.subr.bf16.mxu0 0
        %669 = vmatpush1.bf16.msra.mxu0 0
        %670 = vmatprep.subr.bf16.mxu0 0
        %671 = vmatpush1.bf16.msra.mxu0 0
        %672 = vmatprep.subr.bf16.mxu0 0
        %673 = vmatpush1.bf16.msra.mxu0 0
        %674 = vmatprep.subr.bf16.mxu0 0
        %675 = vmatpush1.bf16.msra.mxu0 0
        %676 = vmatprep.subr.bf16.mxu0 0
        %677 = vmatpush1.bf16.msra.mxu0 0
        %678 = vmatprep.subr.bf16.mxu0 0
        %679 = vmatpush1.bf16.msra.mxu0 0
        %680 = vmatprep.subr.bf16.mxu0 0
        %681 = vmatpush1.bf16.msra.mxu0 0
        %682 = vmatprep.subr.bf16.mxu0 0
        %683 = vmatpush1.bf16.msra.mxu0 0
        %684 = vmatprep.subr.bf16.mxu0 0
        %685 = vmatpush1.bf16.msra.mxu0 0
        %686 = vmatprep.subr.bf16.mxu0 0
        %687 = vmatpush1.bf16.msra.mxu0 0
        %688 = vmatprep.subr.bf16.mxu0 0
        %689 = vmatpush1.bf16.msra.mxu0 0
        %690 = vmatprep.mubr.bf16.mxu0 0
        %691 = vmatmul.mubr.bf16.gmra.mrb[0].mxu0 %v656
        %v692 = vpop.f32.mrb[0].mxu0
        %v693 = vadd.f32 0.0, %v692
        %v694 = vpop.f32.mrb[0].mxu0
        %v695 = vpop.f32.mrb[0].mxu0
        %v696 = vadd.f32 0.0, %v695
        %v697 = vpop.f32.mrb[0].mxu0
        %698 = vdwg.mxu0
        %v699 = vsel %vm365, %v486, %v474
        %v700 = vsel %vm365, %v488, %v476
        %v701 = vsel %vm493, %v699, %v404
        %v702 = vsel %vm493, %v700, %v407
        %v703 = vsel %vm496, %v701, %v480
        %v704 = vsel %vm496, %v702, %v482
        %v705 = vmul.f32 %v693, %v703
        %v706 = vmul.f32 %v696, %v704
        %v707 = vpack.c.bf16 %v706, %v705
        %v708 = vld [vmem:[%s6] sm:$0xf]
        %v709 = vld [vmem:[%s6 + $0x4] sm:$0xf]
        %v710 = vld [vmem:[%s6 + $0x8] sm:$0xf]
        %v711 = vld [vmem:[%s6 + $0xc] sm:$0xf]
        %v712 = vld [vmem:[%s6 + $0x10] sm:$0xf]
        %v713 = vld [vmem:[%s6 + $0x14] sm:$0xf]
        %v714 = vld [vmem:[%s6 + $0x18] sm:$0xf]
        %v715 = vld [vmem:[%s6 + $0x1c] sm:$0xf]
        %v716 = vld [vmem:[%s6 + $0x20] sm:$0xf]
        %v717 = vld [vmem:[%s6 + $0x24] sm:$0xf]
        %v718 = vld [vmem:[%s6 + $0x28] sm:$0xf]
        %v719 = vld [vmem:[%s6 + $0x2c] sm:$0xf]
        %v720 = vld [vmem:[%s6 + $0x30] sm:$0xf]
        %v721 = vld [vmem:[%s6 + $0x34] sm:$0xf]
        %v722 = vld [vmem:[%s6 + $0x38] sm:$0xf]
        %v723 = vld [vmem:[%s6 + $0x3c] sm:$0xf]
        %v740 = vunpack.c.l.b16 %v708
        %v741 = vunpack.c.l.b16 %v709
        %v742 = vunpack.c.l.b16 %v710
        %v743 = vunpack.c.l.b16 %v711
        %v744 = vunpack.c.l.b16 %v712
        %v745 = vunpack.c.l.b16 %v713
        %v746 = vunpack.c.l.b16 %v714
        %v747 = vunpack.c.l.b16 %v715
        %v748 = vunpack.c.l.b16 %v716
        %v749 = vunpack.c.l.b16 %v717
        %v750 = vunpack.c.l.b16 %v718
        %v751 = vunpack.c.l.b16 %v719
        %v752 = vunpack.c.l.b16 %v720
        %v753 = vunpack.c.l.b16 %v721
        %v754 = vunpack.c.l.b16 %v722
        %v755 = vunpack.c.l.b16 %v723
        %v756 = vpack.c.b16 %v741, %v740
        %v757 = vpack.c.b16 %v743, %v742
        %v758 = vpack.c.b16 %v745, %v744
        %v759 = vpack.c.b16 %v747, %v746
        %v760 = vpack.c.b16 %v749, %v748
        %v761 = vpack.c.b16 %v751, %v750
        %v762 = vpack.c.b16 %v753, %v752
        %v763 = vpack.c.b16 %v755, %v754
        %772 = vmatprep.subr.bf16.mxu0 0
        %773 = vmatpush1.bf16.msra.mxu0 %v756
        %774 = vmatprep.subr.bf16.mxu0 0
        %775 = vmatpush1.bf16.msra.mxu0 %v757
        %776 = vmatprep.subr.bf16.mxu0 0
        %777 = vmatpush1.bf16.msra.mxu0 %v758
        %778 = vmatprep.subr.bf16.mxu0 0
        %779 = vmatpush1.bf16.msra.mxu0 %v759
        %780 = vmatprep.subr.bf16.mxu0 0
        %781 = vmatpush1.bf16.msra.mxu0 %v760
        %782 = vmatprep.subr.bf16.mxu0 0
        %783 = vmatpush1.bf16.msra.mxu0 %v761
        %784 = vmatprep.subr.bf16.mxu0 0
        %785 = vmatpush1.bf16.msra.mxu0 %v762
        %786 = vmatprep.subr.bf16.mxu0 0
        %787 = vmatpush1.bf16.msra.mxu0 %v763
        %788 = vmatprep.subr.bf16.mxu0 0
        %789 = vmatpush1.bf16.msra.mxu0 0
        %790 = vmatprep.subr.bf16.mxu0 0
        %791 = vmatpush1.bf16.msra.mxu0 0
        %792 = vmatprep.subr.bf16.mxu0 0
        %793 = vmatpush1.bf16.msra.mxu0 0
        %794 = vmatprep.subr.bf16.mxu0 0
        %795 = vmatpush1.bf16.msra.mxu0 0
        %796 = vmatprep.subr.bf16.mxu0 0
        %797 = vmatpush1.bf16.msra.mxu0 0
        %798 = vmatprep.subr.bf16.mxu0 0
        %799 = vmatpush1.bf16.msra.mxu0 0
        %800 = vmatprep.subr.bf16.mxu0 0
        %801 = vmatpush1.bf16.msra.mxu0 0
        %802 = vmatprep.subr.bf16.mxu0 0
        %803 = vmatpush1.bf16.msra.mxu0 0
        %804 = vmatprep.mubr.bf16.mxu0 0
        %805 = vmatmul.mubr.bf16.gmra.mrb[0].mxu0 %v707
        %v806 = vpop.f32.mrb[0].mxu0
        %v807 = vadd.f32 0.0, %v806
        %v808 = vpop.f32.mrb[0].mxu0
        %v809 = vpop.f32.mrb[0].mxu0
        %v810 = vadd.f32 0.0, %v809
        %v811 = vpop.f32.mrb[0].mxu0
        %812 = vdwg.mxu0
        %v813 = vpack.c.bf16 %v810, %v807
        %v814 = vld [vmem:[%s7] sm:$0xf]
        %v815 = vld [vmem:[%s7 + $0x4] sm:$0xf]
        %v816 = vld [vmem:[%s7 + $0x8] sm:$0xf]
        %v817 = vld [vmem:[%s7 + $0xc] sm:$0xf]
        %v818 = vld [vmem:[%s8] sm:$0x1]
        %v820 = vlaneseq
        %v821 = vshrl.u32 %v820, 7
        %v822 = vsub.s32 0, %v821
        %v823 = vrot.slane %v818, %v822
        %v829 = vunpack.c.l.b16 %v814
        %v830 = vunpack.c.l.b16 %v815
        %v831 = vunpack.c.l.b16 %v816
        %v832 = vunpack.c.l.b16 %v817
        %v833 = vpack.c.b16 %v830, %v829
        %v834 = vpack.c.b16 %v832, %v831
        %v838 = vsel %vm365, %v813, 0
        %840 = vmatprep.subr.bf16.mxu0 0
        %841 = vmatpush1.bf16.msra.mxu0 %v833
        %842 = vmatprep.subr.bf16.mxu0 0
        %843 = vmatpush1.bf16.msra.mxu0 %v834
        %844 = vmatprep.subr.bf16.mxu0 0
        %845 = vmatpush1.bf16.msra.mxu0 0
        %846 = vmatprep.subr.bf16.mxu0 0
        %847 = vmatpush1.bf16.msra.mxu0 0
        %848 = vmatprep.subr.bf16.mxu0 0
        %849 = vmatpush1.bf16.msra.mxu0 0
        %850 = vmatprep.subr.bf16.mxu0 0
        %851 = vmatpush1.bf16.msra.mxu0 0
        %852 = vmatprep.subr.bf16.mxu0 0
        %853 = vmatpush1.bf16.msra.mxu0 0
        %854 = vmatprep.subr.bf16.mxu0 0
        %855 = vmatpush1.bf16.msra.mxu0 0
        %856 = vmatprep.subr.bf16.mxu0 0
        %857 = vmatpush1.bf16.msra.mxu0 0
        %858 = vmatprep.subr.bf16.mxu0 0
        %859 = vmatpush1.bf16.msra.mxu0 0
        %860 = vmatprep.subr.bf16.mxu0 0
        %861 = vmatpush1.bf16.msra.mxu0 0
        %862 = vmatprep.subr.bf16.mxu0 0
        %863 = vmatpush1.bf16.msra.mxu0 0
        %864 = vmatprep.subr.bf16.mxu0 0
        %865 = vmatpush1.bf16.msra.mxu0 0
        %866 = vmatprep.subr.bf16.mxu0 0
        %867 = vmatpush1.bf16.msra.mxu0 0
        %868 = vmatprep.subr.bf16.mxu0 0
        %869 = vmatpush1.bf16.msra.mxu0 0
        %870 = vmatprep.subr.bf16.mxu0 0
        %871 = vmatpush1.bf16.msra.mxu0 0
        %872 = vmatprep.mubr.bf16.mxu0 0
        %873 = vmatmul.mubr.bf16.gmra.mrb[0].mxu0 %v838
        %v874 = vpop.f32.mrb[0].mxu0
        %v875 = vadd.f32 %v823, %v874
        %v876 = vpop.f32.mrb[0].mxu0
        %v877 = vpop.f32.mrb[0].mxu0
        %v878 = vadd.f32 %v823, %v877
        %v879 = vpop.f32.mrb[0].mxu0
        %880 = vdwg.mxu0
        %881 = vst.msk [vmem:[%s326] sm:$0xff] %vm365, %v875
        %882 = vst.msk [vmem:[%s326 + $0x8] sm:$0xff] %vm365, %v878
        %s883 = sand.u32 %s225, 1
        %s884 = scalar_lea.sflag [#allocation3], %s883
        %s885 = sand.u32 %s225, 1
        %s886 = smul.addr %s885, 16
        %s887 = scalar_lea.vmem [#allocation2], %s886
        // Predicated region
        $region57: #{_mha_impl.1} parent=55 // pred_check
          %p888 = pneg %p235
        $region58: #{_mha_impl.1} parent=55 // pred_check_branch
          %890 = sbr.rel (%p888) target = $region60
        $region59: #{_mha_impl.1} parent=55 // pred_region
          %s891 = smul.u32 2, %s23
          %s893 = ssub.s32 256, 256
          %894 = vsyncadd %s884, %s893
          %s895 = smul.addr %s891, 128
          %s896 = scalar_lea.hbm %s9, %s895
          %s897 = sshll.u32 %s887, 4
          %s898 = int_to_ptr.vmem [resolvable:$true] %s897
          %903 = dma.vmem_to_hbm [thread:$0]  %s898, 256, %s896, %s884, 128, 128, 8
        $region60: #{_mha_impl.1} parent=55 // pred_fallthru
          _
      $region56: #{_mha_impl.1} parent=5 // pred_fallthru
        _
      %p904 = scmp.le.s32.totalorder 2, %s18
      // Predicated region
      $region61: #{_mha_impl.1} parent=5 // pred_check
        %p905 = pneg %p904
      $region62: #{_mha_impl.1} parent=5 // pred_check_branch
        %907 = sbr.rel (%p905) target = $region64
      $region63: #{_mha_impl.1} parent=5 // pred_region
        %s908 = ssub.s32 %s18, 2
        // Predicated region
        $region65: #{_mha_impl.1} parent=63 // pred_check
          %p909 = pneg %p241
        $region66: #{_mha_impl.1} parent=63 // pred_check_branch
          %911 = sbr.rel (%p909) target = $region68
        $region67: #{_mha_impl.1} parent=63 // pred_region
          %s912 = sand.u32 %s226, 1
          %s913 = scalar_lea.sflag [#allocation3], %s912
          %s914 = sand.u32 %s226, 1
          %s915 = smul.addr %s914, 16
          %s916 = scalar_lea.vmem [#allocation2], %s915
          %917 = dma.done %s913, 256
        $region68: #{_mha_impl.1} parent=63 // pred_fallthru
          _
      $region64: #{_mha_impl.1} parent=5 // pred_fallthru
        _
    $region6: #{_mha_impl.1} parent=1 // loop_footer
      %s22 = sadd.s32 1, %s18
    $region7: #{_mha_impl.1} parent=1 // loop_footer_branch
      %17 = sbr.rel target = $region3
    $region8: #{_mha_impl.1} parent=1 // loop_exit
      _
    %918 = vsyncpa [#allocation3], 1
    %s919 = scalar_lea.sflag [#allocation3], 1
    %920 = vsyncpa %s919, 1

</llo_original>
